<compile_context>
chip_gen: v6e
topology: v6e:2x2x1
jax: 0.10.0
libtpu: 0.0.40
codegen_flags: <defaults>
</compile_context>

<pallas_src>
import math
from functools import partial

import jax
import jax.numpy as jnp
from jax import lax
from jax.experimental import pallas as pl
from jax.experimental.pallas import tpu as pltpu


def _skip_mha_kernel(x_ref, mask_ref, ln_ref, wqkv_ref, wo_ref,
                     o_ref, ctx_ref, *, head: int, d_k: int, eps: float):
    D = head * d_k

    # ---------------- LayerNormalizationBlock ----------------
    # alpha * (x - mean) / (std + eps) + bias ; std is unbiased (torch default).
    x = x_ref[0].astype(jnp.float32)                       # (S, D)
    alpha = ln_ref[0]                                      # scalar f32 from SMEM
    beta = ln_ref[1]
    mean = jnp.mean(x, axis=-1, keepdims=True)
    cen = x - mean
    var = jnp.sum(cen * cen, axis=-1, keepdims=True) * jnp.float32(1.0 / (D - 1))
    std = jnp.sqrt(var)
    y = alpha * cen / (std + jnp.float32(eps)) + beta      # (S, D) f32

    # ---------------- fused QKV projection (one wide MXU matmul) -------------
    qkv = jnp.dot(y.astype(wqkv_ref.dtype), wqkv_ref[...],
                  preferred_element_type=jnp.float32)      # (S, 3D) f32
    Q = qkv[:, :D]
    K = qkv[:, D:2 * D]
    V = qkv[:, 2 * D:]

    # ---------------- loop-invariant additive mask bias ----------------------
    # mask values are {0,1}; keep -> 0.0, masked -> -1e8.  Pure VALU, no select.
    mask_bias = (mask_ref[0, 0].astype(jnp.float32) - 1.0) * jnp.float32(1.0e8)

    inv_sqrt_dk = jnp.float32(1.0 / math.sqrt(d_k))

    # ---------------- per-head attention, contexts into a (S,D) VMEM slab ----
    for h in range(head):                                  # static unroll
        lo = h * d_k
        hi = lo + d_k
        qh = Q[:, lo:hi]                                   # (S, d_k)
        kh = K[:, lo:hi]
        vh = V[:, lo:hi]

        # 'sd,td->st': contract last dims, no explicit transpose of kh.
        scores = lax.dot_general(
            qh, kh, dimension_numbers=(((1,), (1,)), ((), ())),
            preferred_element_type=jnp.float32)            # (S, S)
        scores = scores * inv_sqrt_dk + mask_bias

        m = jnp.max(scores, axis=-1, keepdims=True)
        p = jnp.exp(scores - m)
        l = jnp.sum(p, axis=-1, keepdims=True)
        probs = p * pl.reciprocal(l, approx=True)          # divide on the EUP

        # TODO(synk): attention-prob dropout is identity here (inference mode);
        # training would use pltpu.prng_seed / pltpu.stateful_bernoulli.
        ctx_ref[:, lo:hi] = jnp.dot(probs, vh, preferred_element_type=jnp.float32)

    # ---------------- single output projection + residual skip ---------------
    attn = jnp.dot(ctx_ref[...], wo_ref[...], preferred_element_type=jnp.float32)
    # Residual dropout is also identity (inference).
    o_ref[0] = (x + attn).astype(o_ref.dtype)


def skip_connection_block(x, mask, Wq, Wk, Wv, Wo, alpha, bias,
                          *, head: int, eps: float = 1e-7):
    """x: [B,S,D]; mask: [B,1,S,S] (0 = masked); W*: [D,D] torch Linear weights;
    alpha/bias: [1] LayerNormalizationBlock parameters."""
    B, S, D = x.shape
    assert D % head == 0
    d_k = D // head

    # Fuse / pre-transpose weights so the kernel does plain x @ W.
    wqkvT = jnp.concatenate([Wq.T, Wk.T, Wv.T], axis=1)    # (D, 3D)
    woT = Wo.T                                             # (D, D)
    mask_i8 = mask.astype(jnp.int8)                        # 4x smaller mask DMA
    ln_params = jnp.concatenate(
        [jnp.reshape(alpha, (-1,)), jnp.reshape(bias, (-1,))]).astype(jnp.float32)

    kernel = partial(_skip_mha_kernel, head=head, d_k=d_k, eps=eps)

    # TODO(synk): for large S, restructure to a flash-style (B, q-tile, kv-tile)
    # grid with online-softmax accumulators so the (S,S) scores never live whole.
    return pl.pallas_call(
        kernel,
        out_shape=jax.ShapeDtypeStruct((B, S, D), x.dtype),
        grid_spec=pltpu.PrefetchScalarGridSpec(
            num_scalar_prefetch=0,
            grid=(B,),
            in_specs=[
                pl.BlockSpec((1, S, D), lambda b: (b, 0, 0)),           # x
                pl.BlockSpec((1, 1, S, S), lambda b: (b, 0, 0, 0)),     # mask (int8)
                pl.BlockSpec(memory_space=pltpu.MemorySpace.SMEM),      # [alpha, bias]
                pl.BlockSpec((D, 3 * D), lambda b: (0, 0)),             # fused WqkvT
                pl.BlockSpec((D, D), lambda b: (0, 0)),                 # WoT
            ],
            out_specs=pl.BlockSpec((1, S, D), lambda b: (b, 0, 0)),
            scratch_shapes=[pltpu.VMEM((S, D), jnp.float32)],           # ctx slab
        ),
        compiler_params=pltpu.CompilerParams(
            dimension_semantics=("parallel",),          # batch shards across TCs
            vmem_limit_bytes=32 * 1024 * 1024,          # raise v5e's 16 MiB default
        ),
    )(x, mask_i8, ln_params, wqkvT, woT)


def ref_skip_connection(x, mask, Wq, Wk, Wv, Wo, alpha, bias,
                        *, head: int, eps: float = 1e-7):
    """Pure-JAX reference reproducing the PyTorch forward (dropout = identity)."""
    B, S, D = x.shape
    d_k = D // head
    mean = jnp.mean(x, axis=-1, keepdims=True)
    std = jnp.std(x, axis=-1, ddof=1, keepdims=True)       # torch.std: unbiased
    y = alpha * (x - mean) / (std + eps) + bias

    Q = y @ Wq.T
    K = y @ Wk.T
    V = y @ Wv.T
    Qh = Q.reshape(B, S, head, d_k).transpose(0, 2, 1, 3)
    Kh = K.reshape(B, S, head, d_k).transpose(0, 2, 1, 3)
    Vh = V.reshape(B, S, head, d_k).transpose(0, 2, 1, 3)
    scores = (Qh @ jnp.swapaxes(Kh, -2, -1)) / math.sqrt(d_k)
    scores = jnp.where(mask == 0, -1.0e8, scores)
    probs = jax.nn.softmax(scores, axis=-1)
    ctx = (probs @ Vh).transpose(0, 2, 1, 3).reshape(B, S, D)
    return x + ctx @ Wo.T


if __name__ == "__main__":
    B, S, d_model, head = 2, 8, 32, 4

    key = jax.random.PRNGKey(0)
    kx, kwq, kwk, kwv, kwo = jax.random.split(key, 5)

    x = jax.random.normal(kx, (B, S, d_model), dtype=jnp.float32)

    bound = 1.0 / math.sqrt(d_model)
    Wq = jax.random.uniform(kwq, (d_model, d_model), jnp.float32, -bound, bound)
    Wk = jax.random.uniform(kwk, (d_model, d_model), jnp.float32, -bound, bound)
    Wv = jax.random.uniform(kwv, (d_model, d_model), jnp.float32, -bound, bound)
    Wo = jax.random.uniform(kwo, (d_model, d_model), jnp.float32, -bound, bound)

    # Non-trivial LayerNormalizationBlock parameters (exercise alpha/bias path).
    alpha = jnp.full((1,), 1.25, jnp.float32)
    bias = jnp.full((1,), -0.10, jnp.float32)

    # Causal mask [B, 1, S, S]: 1 = keep, 0 = masked.
    causal = jnp.tril(jnp.ones((S, S), dtype=jnp.int32))
    mask = jnp.broadcast_to(causal[None, None, :, :], (B, 1, S, S))

    out = skip_connection_block(x, mask, Wq, Wk, Wv, Wo, alpha, bias, head=head)
    out = jax.block_until_ready(out)

    ref = ref_skip_connection(x, mask, Wq, Wk, Wv, Wo, alpha, bias, head=head)
    assert out.shape == (B, S, d_model)
    # Tolerance accounts for the EUP approximate-reciprocal softmax normalization.
    assert jnp.allclose(out, ref, rtol=2e-3, atol=2e-3), "mismatch vs reference"

    print("KERNEL_OK")
</pallas_src>

<mosaic_0001>
module attributes {stable_mosaic.version = 11 : i64} {
  func.func @_skip_mha_kernel(%arg0: i32, %arg1: memref<1x8x32xf32, #tpu.memory_space<vmem>>, %arg2: memref<1x1x8x8xi8, #tpu.memory_space<vmem>>, %arg3: memref<2xf32, #tpu.memory_space<smem>>, %arg4: memref<32x96xf32, #tpu.memory_space<vmem>>, %arg5: memref<32x32xf32, #tpu.memory_space<vmem>>, %arg6: memref<1x8x32xf32, #tpu.memory_space<vmem>>, %arg7: memref<8x32xf32, #tpu.memory_space<vmem>>) attributes {dimension_semantics = [#tpu.dimension_semantics<parallel>], iteration_bounds = array<i64: 2>, scalar_prefetch = 0 : i64, scratch_operands = 1 : i64, tpu.core_type = #tpu.core_type<tc>, window_params = [{transform_indices = @transform_0, window_bounds = array<i64: 1, 8, 32>}, {transform_indices = @transform_1, window_bounds = array<i64: 1, 1, 8, 8>}, {transform_indices = @transform_2, window_bounds = array<i64: 2>}, {pipeline_mode = #tpu.pipeline_mode<synchronous>, transform_indices = @transform_3, window_bounds = array<i64: 32, 96>}, {pipeline_mode = #tpu.pipeline_mode<synchronous>, transform_indices = @transform_4, window_bounds = array<i64: 32, 32>}, {transform_indices = @transform_5, window_bounds = array<i64: 1, 8, 32>}]} {
    %c0 = arith.constant 0 : index
    %c0_0 = arith.constant 0 : index
    %c0_1 = arith.constant 0 : index
    %0 = vector.load %arg1[%c0, %c0_0, %c0_1] : memref<1x8x32xf32, #tpu.memory_space<vmem>>, vector<1x8x32xf32>
    %1 = vector.shape_cast %0 : vector<1x8x32xf32> to vector<8x32xf32>
    %c0_2 = arith.constant 0 : index
    %2 = memref.load %arg3[%c0_2] : memref<2xf32, #tpu.memory_space<smem>>
    %c1 = arith.constant 1 : index
    %3 = memref.load %arg3[%c1] : memref<2xf32, #tpu.memory_space<smem>>
    %cst = arith.constant dense<0.000000e+00> : vector<8xf32>
    %4 = vector.multi_reduction <add>, %1, %cst [1] : vector<8x32xf32> to vector<8xf32>
    %5 = vector.shape_cast %4 : vector<8xf32> to vector<8x1xf32>
    %cst_3 = arith.constant 3.200000e+01 : f32
    %6 = vector.broadcast %cst_3 : f32 to vector<8x1xf32>
    %7 = arith.divf %5, %6 : vector<8x1xf32>
    %8 = vector.broadcast %7 : vector<8x1xf32> to vector<8x32xf32>
    %9 = arith.subf %1, %8 : vector<8x32xf32>
    %10 = arith.mulf %9, %9 : vector<8x32xf32>
    %cst_4 = arith.constant dense<0.000000e+00> : vector<8xf32>
    %11 = vector.multi_reduction <add>, %10, %cst_4 [1] : vector<8x32xf32> to vector<8xf32>
    %12 = vector.shape_cast %11 : vector<8xf32> to vector<8x1xf32>
    %cst_5 = arith.constant 0.0322580636 : f32
    %13 = vector.broadcast %cst_5 : f32 to vector<8x1xf32>
    %14 = arith.mulf %12, %13 : vector<8x1xf32>
    %15 = math.sqrt %14 : vector<8x1xf32>
    %16 = vector.broadcast %2 : f32 to vector<8x32xf32>
    %17 = arith.mulf %16, %9 : vector<8x32xf32>
    %cst_6 = arith.constant 1.000000e-07 : f32
    %18 = vector.broadcast %cst_6 : f32 to vector<8x1xf32>
    %19 = arith.addf %15, %18 : vector<8x1xf32>
    %20 = vector.broadcast %19 : vector<8x1xf32> to vector<8x32xf32>
    %21 = arith.divf %17, %20 : vector<8x32xf32>
    %22 = vector.broadcast %3 : f32 to vector<8x32xf32>
    %23 = arith.addf %21, %22 : vector<8x32xf32>
    %c0_7 = arith.constant 0 : index
    %c0_8 = arith.constant 0 : index
    %24 = vector.load %arg4[%c0_7, %c0_8] : memref<32x96xf32, #tpu.memory_space<vmem>>, vector<32x96xf32>
    %cst_9 = arith.constant dense<0.000000e+00> : vector<8x96xf32>
    %25 = tpu.matmul %23, %24, %cst_9 {dimension_numbers = #tpu.dot_dimension_numbers<[1], [0], [0], [1], [0, 0, 1, 1], [], []>} : vector<8x32xf32>, vector<32x96xf32>, vector<8x96xf32> -> vector<8x96xf32>
    %26 = vector.extract_strided_slice %25 {offsets = [0, 0], sizes = [8, 32], strides = [1, 1]} : vector<8x96xf32> to vector<8x32xf32>
    %27 = vector.extract_strided_slice %25 {offsets = [0, 32], sizes = [8, 32], strides = [1, 1]} : vector<8x96xf32> to vector<8x32xf32>
    %28 = vector.extract_strided_slice %25 {offsets = [0, 64], sizes = [8, 32], strides = [1, 1]} : vector<8x96xf32> to vector<8x32xf32>
    %c0_10 = arith.constant 0 : index
    %c0_11 = arith.constant 0 : index
    %c0_12 = arith.constant 0 : index
    %c0_13 = arith.constant 0 : index
    %29 = vector.load %arg2[%c0_10, %c0_11, %c0_12, %c0_13] : memref<1x1x8x8xi8, #tpu.memory_space<vmem>>, vector<1x1x8x8xi8>
    %30 = vector.shape_cast %29 : vector<1x1x8x8xi8> to vector<8x8xi8>
    %31 = arith.sitofp %30 : vector<8x8xi8> to vector<8x8xf32>
    %cst_14 = arith.constant 1.000000e+00 : f32
    %32 = vector.broadcast %cst_14 : f32 to vector<8x8xf32>
    %33 = arith.subf %31, %32 : vector<8x8xf32>
    %cst_15 = arith.constant 1.000000e+08 : f32
    %34 = vector.broadcast %cst_15 : f32 to vector<8x8xf32>
    %35 = arith.mulf %33, %34 : vector<8x8xf32>
    %36 = vector.extract_strided_slice %26 {offsets = [0, 0], sizes = [8, 8], strides = [1, 1]} : vector<8x32xf32> to vector<8x8xf32>
    %37 = vector.extract_strided_slice %27 {offsets = [0, 0], sizes = [8, 8], strides = [1, 1]} : vector<8x32xf32> to vector<8x8xf32>
    %38 = vector.extract_strided_slice %28 {offsets = [0, 0], sizes = [8, 8], strides = [1, 1]} : vector<8x32xf32> to vector<8x8xf32>
    %cst_16 = arith.constant dense<0.000000e+00> : vector<8x8xf32>
    %39 = tpu.matmul %36, %37, %cst_16 {dimension_numbers = #tpu.dot_dimension_numbers<[1], [1], [0], [0], [0, 0, 1, 0], [], []>} : vector<8x8xf32>, vector<8x8xf32>, vector<8x8xf32> -> vector<8x8xf32>
    %cst_17 = arith.constant 0.353553385 : f32
    %40 = vector.broadcast %cst_17 : f32 to vector<8x8xf32>
    %41 = arith.mulf %39, %40 : vector<8x8xf32>
    %42 = arith.addf %41, %35 : vector<8x8xf32>
    %cst_18 = arith.constant dense<0xFF800000> : vector<8xf32>
    %43 = vector.multi_reduction <maximumf>, %42, %cst_18 [1] : vector<8x8xf32> to vector<8xf32>
    %44 = vector.shape_cast %43 : vector<8xf32> to vector<8x1xf32>
    %45 = vector.broadcast %44 : vector<8x1xf32> to vector<8x8xf32>
    %46 = arith.subf %42, %45 : vector<8x8xf32>
    %47 = math.exp %46 : vector<8x8xf32>
    %cst_19 = arith.constant dense<0.000000e+00> : vector<8xf32>
    %48 = vector.multi_reduction <add>, %47, %cst_19 [1] : vector<8x8xf32> to vector<8xf32>
    %49 = vector.shape_cast %48 : vector<8xf32> to vector<8x1xf32>
    %50 = tpu.reciprocal %49 {approx = true} : vector<8x1xf32> -> vector<8x1xf32>
    %51 = vector.broadcast %50 : vector<8x1xf32> to vector<8x8xf32>
    %52 = arith.mulf %47, %51 : vector<8x8xf32>
    %cst_20 = arith.constant dense<0.000000e+00> : vector<8x8xf32>
    %53 = tpu.matmul %52, %38, %cst_20 {dimension_numbers = #tpu.dot_dimension_numbers<[1], [0], [0], [1], [0, 0, 1, 1], [], []>} : vector<8x8xf32>, vector<8x8xf32>, vector<8x8xf32> -> vector<8x8xf32>
    %c0_21 = arith.constant 0 : index
    %c0_22 = arith.constant 0 : index
    %54 = vector.load %arg7[%c0_21, %c0_22] : memref<8x32xf32, #tpu.memory_space<vmem>>, vector<8x8xf32>
    tpu.vector_store %arg7[%c0_21, %c0_22], %53 {strides = array<i32>} : memref<8x32xf32, #tpu.memory_space<vmem>>, vector<8x8xf32>,
    %55 = vector.extract_strided_slice %26 {offsets = [0, 8], sizes = [8, 8], strides = [1, 1]} : vector<8x32xf32> to vector<8x8xf32>
    %56 = vector.extract_strided_slice %27 {offsets = [0, 8], sizes = [8, 8], strides = [1, 1]} : vector<8x32xf32> to vector<8x8xf32>
    %57 = vector.extract_strided_slice %28 {offsets = [0, 8], sizes = [8, 8], strides = [1, 1]} : vector<8x32xf32> to vector<8x8xf32>
    %cst_23 = arith.constant dense<0.000000e+00> : vector<8x8xf32>
    %58 = tpu.matmul %55, %56, %cst_23 {dimension_numbers = #tpu.dot_dimension_numbers<[1], [1], [0], [0], [0, 0, 1, 0], [], []>} : vector<8x8xf32>, vector<8x8xf32>, vector<8x8xf32> -> vector<8x8xf32>
    %cst_24 = arith.constant 0.353553385 : f32
    %59 = vector.broadcast %cst_24 : f32 to vector<8x8xf32>
    %60 = arith.mulf %58, %59 : vector<8x8xf32>
    %61 = arith.addf %60, %35 : vector<8x8xf32>
    %cst_25 = arith.constant dense<0xFF800000> : vector<8xf32>
    %62 = vector.multi_reduction <maximumf>, %61, %cst_25 [1] : vector<8x8xf32> to vector<8xf32>
    %63 = vector.shape_cast %62 : vector<8xf32> to vector<8x1xf32>
    %64 = vector.broadcast %63 : vector<8x1xf32> to vector<8x8xf32>
    %65 = arith.subf %61, %64 : vector<8x8xf32>
    %66 = math.exp %65 : vector<8x8xf32>
    %cst_26 = arith.constant dense<0.000000e+00> : vector<8xf32>
    %67 = vector.multi_reduction <add>, %66, %cst_26 [1] : vector<8x8xf32> to vector<8xf32>
    %68 = vector.shape_cast %67 : vector<8xf32> to vector<8x1xf32>
    %69 = tpu.reciprocal %68 {approx = true} : vector<8x1xf32> -> vector<8x1xf32>
    %70 = vector.broadcast %69 : vector<8x1xf32> to vector<8x8xf32>
    %71 = arith.mulf %66, %70 : vector<8x8xf32>
    %cst_27 = arith.constant dense<0.000000e+00> : vector<8x8xf32>
    %72 = tpu.matmul %71, %57, %cst_27 {dimension_numbers = #tpu.dot_dimension_numbers<[1], [0], [0], [1], [0, 0, 1, 1], [], []>} : vector<8x8xf32>, vector<8x8xf32>, vector<8x8xf32> -> vector<8x8xf32>
    %c0_28 = arith.constant 0 : index
    %c8 = arith.constant 8 : index
    %73 = vector.load %arg7[%c0_28, %c8] : memref<8x32xf32, #tpu.memory_space<vmem>>, vector<8x8xf32>
    tpu.vector_store %arg7[%c0_28, %c8], %72 {strides = array<i32>} : memref<8x32xf32, #tpu.memory_space<vmem>>, vector<8x8xf32>,
    %74 = vector.extract_strided_slice %26 {offsets = [0, 16], sizes = [8, 8], strides = [1, 1]} : vector<8x32xf32> to vector<8x8xf32>
    %75 = vector.extract_strided_slice %27 {offsets = [0, 16], sizes = [8, 8], strides = [1, 1]} : vector<8x32xf32> to vector<8x8xf32>
    %76 = vector.extract_strided_slice %28 {offsets = [0, 16], sizes = [8, 8], strides = [1, 1]} : vector<8x32xf32> to vector<8x8xf32>
    %cst_29 = arith.constant dense<0.000000e+00> : vector<8x8xf32>
    %77 = tpu.matmul %74, %75, %cst_29 {dimension_numbers = #tpu.dot_dimension_numbers<[1], [1], [0], [0], [0, 0, 1, 0], [], []>} : vector<8x8xf32>, vector<8x8xf32>, vector<8x8xf32> -> vector<8x8xf32>
    %cst_30 = arith.constant 0.353553385 : f32
    %78 = vector.broadcast %cst_30 : f32 to vector<8x8xf32>
    %79 = arith.mulf %77, %78 : vector<8x8xf32>
    %80 = arith.addf %79, %35 : vector<8x8xf32>
    %cst_31 = arith.constant dense<0xFF800000> : vector<8xf32>
    %81 = vector.multi_reduction <maximumf>, %80, %cst_31 [1] : vector<8x8xf32> to vector<8xf32>
    %82 = vector.shape_cast %81 : vector<8xf32> to vector<8x1xf32>
    %83 = vector.broadcast %82 : vector<8x1xf32> to vector<8x8xf32>
    %84 = arith.subf %80, %83 : vector<8x8xf32>
    %85 = math.exp %84 : vector<8x8xf32>
    %cst_32 = arith.constant dense<0.000000e+00> : vector<8xf32>
    %86 = vector.multi_reduction <add>, %85, %cst_32 [1] : vector<8x8xf32> to vector<8xf32>
    %87 = vector.shape_cast %86 : vector<8xf32> to vector<8x1xf32>
    %88 = tpu.reciprocal %87 {approx = true} : vector<8x1xf32> -> vector<8x1xf32>
    %89 = vector.broadcast %88 : vector<8x1xf32> to vector<8x8xf32>
    %90 = arith.mulf %85, %89 : vector<8x8xf32>
    %cst_33 = arith.constant dense<0.000000e+00> : vector<8x8xf32>
    %91 = tpu.matmul %90, %76, %cst_33 {dimension_numbers = #tpu.dot_dimension_numbers<[1], [0], [0], [1], [0, 0, 1, 1], [], []>} : vector<8x8xf32>, vector<8x8xf32>, vector<8x8xf32> -> vector<8x8xf32>
    %c0_34 = arith.constant 0 : index
    %c16 = arith.constant 16 : index
    %92 = vector.load %arg7[%c0_34, %c16] : memref<8x32xf32, #tpu.memory_space<vmem>>, vector<8x8xf32>
    tpu.vector_store %arg7[%c0_34, %c16], %91 {strides = array<i32>} : memref<8x32xf32, #tpu.memory_space<vmem>>, vector<8x8xf32>,
    %93 = vector.extract_strided_slice %26 {offsets = [0, 24], sizes = [8, 8], strides = [1, 1]} : vector<8x32xf32> to vector<8x8xf32>
    %94 = vector.extract_strided_slice %27 {offsets = [0, 24], sizes = [8, 8], strides = [1, 1]} : vector<8x32xf32> to vector<8x8xf32>
    %95 = vector.extract_strided_slice %28 {offsets = [0, 24], sizes = [8, 8], strides = [1, 1]} : vector<8x32xf32> to vector<8x8xf32>
    %cst_35 = arith.constant dense<0.000000e+00> : vector<8x8xf32>
    %96 = tpu.matmul %93, %94, %cst_35 {dimension_numbers = #tpu.dot_dimension_numbers<[1], [1], [0], [0], [0, 0, 1, 0], [], []>} : vector<8x8xf32>, vector<8x8xf32>, vector<8x8xf32> -> vector<8x8xf32>
    %cst_36 = arith.constant 0.353553385 : f32
    %97 = vector.broadcast %cst_36 : f32 to vector<8x8xf32>
    %98 = arith.mulf %96, %97 : vector<8x8xf32>
    %99 = arith.addf %98, %35 : vector<8x8xf32>
    %cst_37 = arith.constant dense<0xFF800000> : vector<8xf32>
    %100 = vector.multi_reduction <maximumf>, %99, %cst_37 [1] : vector<8x8xf32> to vector<8xf32>
    %101 = vector.shape_cast %100 : vector<8xf32> to vector<8x1xf32>
    %102 = vector.broadcast %101 : vector<8x1xf32> to vector<8x8xf32>
    %103 = arith.subf %99, %102 : vector<8x8xf32>
    %104 = math.exp %103 : vector<8x8xf32>
    %cst_38 = arith.constant dense<0.000000e+00> : vector<8xf32>
    %105 = vector.multi_reduction <add>, %104, %cst_38 [1] : vector<8x8xf32> to vector<8xf32>
    %106 = vector.shape_cast %105 : vector<8xf32> to vector<8x1xf32>
    %107 = tpu.reciprocal %106 {approx = true} : vector<8x1xf32> -> vector<8x1xf32>
    %108 = vector.broadcast %107 : vector<8x1xf32> to vector<8x8xf32>
    %109 = arith.mulf %104, %108 : vector<8x8xf32>
    %cst_39 = arith.constant dense<0.000000e+00> : vector<8x8xf32>
    %110 = tpu.matmul %109, %95, %cst_39 {dimension_numbers = #tpu.dot_dimension_numbers<[1], [0], [0], [1], [0, 0, 1, 1], [], []>} : vector<8x8xf32>, vector<8x8xf32>, vector<8x8xf32> -> vector<8x8xf32>
    %c0_40 = arith.constant 0 : index
    %c24 = arith.constant 24 : index
    %111 = vector.load %arg7[%c0_40, %c24] : memref<8x32xf32, #tpu.memory_space<vmem>>, vector<8x8xf32>
    tpu.vector_store %arg7[%c0_40, %c24], %110 {strides = array<i32>} : memref<8x32xf32, #tpu.memory_space<vmem>>, vector<8x8xf32>,
    %c0_41 = arith.constant 0 : index
    %c0_42 = arith.constant 0 : index
    %112 = vector.load %arg7[%c0_41, %c0_42] : memref<8x32xf32, #tpu.memory_space<vmem>>, vector<8x32xf32>
    %c0_43 = arith.constant 0 : index
    %c0_44 = arith.constant 0 : index
    %113 = vector.load %arg5[%c0_43, %c0_44] : memref<32x32xf32, #tpu.memory_space<vmem>>, vector<32x32xf32>
    %cst_45 = arith.constant dense<0.000000e+00> : vector<8x32xf32>
    %114 = tpu.matmul %112, %113, %cst_45 {dimension_numbers = #tpu.dot_dimension_numbers<[1], [0], [0], [1], [0, 0, 1, 1], [], []>} : vector<8x32xf32>, vector<32x32xf32>, vector<8x32xf32> -> vector<8x32xf32>
    %115 = arith.addf %1, %114 : vector<8x32xf32>
    %c0_46 = arith.constant 0 : index
    %c0_47 = arith.constant 0 : index
    %c0_48 = arith.constant 0 : index
    %116 = vector.load %arg6[%c0_46, %c0_47, %c0_48] : memref<1x8x32xf32, #tpu.memory_space<vmem>>, vector<1x8x32xf32>
    %117 = vector.shape_cast %116 : vector<1x8x32xf32> to vector<8x32xf32>
    %118 = vector.shape_cast %115 : vector<8x32xf32> to vector<1x8x32xf32>
    tpu.vector_store %arg6[%c0_46, %c0_47, %c0_48], %118 {strides = array<i32>} : memref<1x8x32xf32, #tpu.memory_space<vmem>>, vector<1x8x32xf32>,
    return
  }
  func.func @transform_0(%arg0: i32) -> (i32, i32, i32) {
    %c0_i32 = arith.constant 0 : i32
    %c0_i32_0 = arith.constant 0 : i32
    %c0_i32_1 = arith.constant 0 : i32
    return %arg0, %c0_i32, %c0_i32_0 : i32, i32, i32
  }
  func.func @transform_1(%arg0: i32) -> (i32, i32, i32, i32) {
    %c0_i32 = arith.constant 0 : i32
    %c0_i32_0 = arith.constant 0 : i32
    %c0_i32_1 = arith.constant 0 : i32
    %c0_i32_2 = arith.constant 0 : i32
    return %arg0, %c0_i32, %c0_i32_0, %c0_i32_1 : i32, i32, i32, i32
  }
  func.func @transform_2(%arg0: i32) -> i32 {
    %c0_i32 = arith.constant 0 : i32
    %c0_i32_0 = arith.constant 0 : i32
    return %c0_i32 : i32
  }
  func.func @transform_3(%arg0: i32) -> (i32, i32) {
    %c0_i32 = arith.constant 0 : i32
    %c0_i32_0 = arith.constant 0 : i32
    %c0_i32_1 = arith.constant 0 : i32
    return %c0_i32, %c0_i32_0 : i32, i32
  }
  func.func @transform_4(%arg0: i32) -> (i32, i32) {
    %c0_i32 = arith.constant 0 : i32
    %c0_i32_0 = arith.constant 0 : i32
    %c0_i32_1 = arith.constant 0 : i32
    return %c0_i32, %c0_i32_0 : i32, i32
  }
  func.func @transform_5(%arg0: i32) -> (i32, i32, i32) {
    %c0_i32 = arith.constant 0 : i32
    %c0_i32_0 = arith.constant 0 : i32
    %c0_i32_1 = arith.constant 0 : i32
    return %arg0, %c0_i32, %c0_i32_0 : i32, i32, i32
  }
}

</mosaic_0001>

<llo_original>
// kernel: tpu_custom_call.1
$region0: #{tpu_custom_call.1}
  #allocation0 [shape = 'u32[]', space=smem, size = 0x4, offset = 0x4, fixed_abs, tag = 'smem constant byte address 0x4 - core index']
  #allocation1 [shape = 'u32[144,128]{1,0:T(1,128)}', space=vmem, size = 0x12000, scoped, tag = 'internal scratch']
  #allocation2 [shape = 'f32[8,32]{1,0:T(8,128)}', space=vmem, size = 0x1000, scoped, tag = 'scratch operand']
  %s0 = inlined_call_operand.hbm [shape: f32[2,8,32], index: 0, kind: input, shape index: {}]
  %s1 = inlined_call_operand.hbm [shape: s8[2,1,8,8], index: 1, kind: input, shape index: {}]
  %s2 = inlined_call_operand.vmem [shape: f32[2], index: 2, kind: input, shape index: {}]
  %s3 = inlined_call_operand.hbm [shape: f32[32,96], index: 3, kind: input, shape index: {}]
  %s4 = inlined_call_operand.hbm [shape: f32[32,32], index: 4, kind: input, shape index: {}]
  %s5 = inlined_call_operand.hbm [shape: f32[2,8,32], index: 5, kind: output, shape index: {}]
  %s6 = sld [smem:[#allocation0]]
  $region73: #{tpu_custom_call.1} parent=0
    _
  %s8 = ssub.s32 1, %s6
  %s9 = scalar_select 0, %s8, %s6
  $region1: #{tpu_custom_call.1} parent=0
    #allocation3 [shape = 'u8[8192]{0}', space=vmem, size = 0x2000, scoped, tag = 'input window, operand 0']
    #allocation4 [shape = 's32[2]{0}', space=sflag, size = 0x8, scoped, tag = 'scoped memory for tpu_custom_call.1']
    #allocation5 [shape = 's32[2]{0}', space=sflag, size = 0x8, scoped, tag = 'scoped memory for tpu_custom_call.1']
    #allocation6 [shape = 's32[2]{0}', space=sflag, size = 0x8, scoped, tag = 'scoped memory for tpu_custom_call.1']
    #allocation7 [shape = 'u8[2048]{0}', space=vmem, size = 0x800, scoped, tag = 'input window, operand 1']
    #allocation8 [shape = 's32[2]{0}', space=sflag, size = 0x8, scoped, tag = 'scoped memory for tpu_custom_call.1']
    #allocation9 [shape = 'u8[512]{0}', space=smem, size = 0x200, scoped, tag = 'input window, operand 2, single buffered']
    #allocation10 [shape = 'u8[16384]{0}', space=vmem, size = 0x4000, scoped, tag = 'input window, operand 3, single buffered']
    #allocation11 [shape = 'u8[16384]{0}', space=vmem, size = 0x4000, scoped, tag = 'input window, operand 4, single buffered']
    #allocation12 [shape = 's32[1]{0}', space=sflag, size = 0x4, scoped, tag = 'scoped memory for tpu_custom_call.1']
    #allocation13 [shape = 'u8[8192]{0}', space=vmem, size = 0x2000, scoped, tag = 'output window, operand 0']
    %10 = vsyncpa [#allocation4], 0
    %s11 = scalar_lea.sflag [#allocation4], 1
    %12 = vsyncpa %s11, 0
    %13 = vsyncpa [#allocation8], 0
    %s14 = scalar_lea.sflag [#allocation8], 1
    %15 = vsyncpa %s14, 0
    %16 = vsyncpa [#allocation6], 0
    %17 = vsyncpa [#allocation12], 0
    %18 = vsyncpa [#allocation5], 0
    %s19 = scalar_lea.sflag [#allocation5], 1
    %20 = vsyncpa %s19, 0
    loop: start=0, step=1, limit=4
    $region2: #{tpu_custom_call.1} parent=1 // loop_pre_header
      _
    $region3: #{tpu_custom_call.1} parent=1 // loop_header
      %s22 = sphi 0, %s26
      %p23 = scmp.ge.s32.totalorder %s22, 4
      %s32 = sphi 0, %s34
      %s35 = sphi 0, %s32
      %s36 = sphi 0, %s35
      %s52 = sphi 0, %s36
      %s58 = sphi 0, %s60
      %s61 = sphi 0, %s58
      %s62 = sphi 0, %s61
      %s78 = sphi 0, %s62
      %s82 = sphi 0, %s82
      %s84 = sphi 0, %s82
      %s85 = sphi 0, %s84
      %s99 = sphi 0, %s85
      %s103 = sphi 0, %s103
      %s105 = sphi 0, %s103
      %s106 = sphi 0, %s105
      %s120 = sphi 0, %s106
      %s124 = sphi 0, %s124
      %s126 = sphi 0, %s124
      %s127 = sphi 0, %s126
      %s141 = sphi 0, %s127
      %s147 = sphi 0, %s149
      %s150 = sphi 0, %s147
      %s151 = sphi 0, %s150
      %s167 = sphi 0, %s151
    $region4: #{tpu_custom_call.1} parent=1 // loop_header_branch
      %25 = sbr.rel (%p23) target = $region8
    $region5: #{tpu_custom_call.1} parent=1 // loop_body
      %s27 = ssub.s32 %s22, 1
      %s28 = ssub.s32 %s22, 2
      %s29 = sadd.s32 %s22, 1
      %s30 = ssub.s32 %s22, %s29
      %p31 = scmp.eq.s32.totalorder %s30, 0
      %s33 = sadd.s32 %s32, 1
      %s34 = scalar_select %p31, %s32, %s33
      %p37 = pneg %p31
      %p38 = scmp.eq.s32.totalorder %s22, 1
      %p39 = por %p37, %p38
      %p40 = scmp.ne.s32.totalorder %s32, %s35
      %p41 = scmp.eq.s32.totalorder %s22, 0
      %p42 = por %p40, %p41
      %p43 = scmp.ne.s32.totalorder %s32, %s35
      %p44 = scmp.eq.s32.totalorder %s27, 1
      %p45 = por %p43, %p44
      %p46 = scmp.ne.s32.totalorder %s35, %s36
      %p47 = scmp.eq.s32.totalorder %s27, 0
      %p48 = por %p46, %p47
      %p49 = scmp.ne.s32.totalorder %s35, %s36
      %p50 = scmp.eq.s32.totalorder %s28, 1
      %p51 = por %p49, %p50
      %p53 = scmp.ne.s32.totalorder %s36, %s52
      %p54 = scmp.eq.s32.totalorder %s28, 0
      %p55 = por %p53, %p54
      %s56 = ssub.s32 %s22, %s29
      %p57 = scmp.eq.s32.totalorder %s56, 0
      %s59 = sadd.s32 %s58, 1
      %s60 = scalar_select %p57, %s58, %s59
      %p63 = pneg %p57
      %p64 = scmp.eq.s32.totalorder %s22, 1
      %p65 = por %p63, %p64
      %p66 = scmp.ne.s32.totalorder %s58, %s61
      %p67 = scmp.eq.s32.totalorder %s22, 0
      %p68 = por %p66, %p67
      %p69 = scmp.ne.s32.totalorder %s58, %s61
      %p70 = scmp.eq.s32.totalorder %s27, 1
      %p71 = por %p69, %p70
      %p72 = scmp.ne.s32.totalorder %s61, %s62
      %p73 = scmp.eq.s32.totalorder %s27, 0
      %p74 = por %p72, %p73
      %p75 = scmp.ne.s32.totalorder %s61, %s62
      %p76 = scmp.eq.s32.totalorder %s28, 1
      %p77 = por %p75, %p76
      %p79 = scmp.ne.s32.totalorder %s62, %s78
      %p80 = scmp.eq.s32.totalorder %s28, 0
      %p81 = por %p79, %p80
      %s83 = sadd.s32 %s82, 1
      %p86 = scmp.eq.s32.totalorder %s22, 1
      %p87 = scmp.ne.s32.totalorder %s82, %s84
      %p88 = scmp.eq.s32.totalorder %s22, 0
      %p89 = por %p87, %p88
      %p90 = scmp.ne.s32.totalorder %s82, %s84
      %p91 = scmp.eq.s32.totalorder %s27, 1
      %p92 = por %p90, %p91
      %p93 = scmp.ne.s32.totalorder %s84, %s85
      %p94 = scmp.eq.s32.totalorder %s27, 0
      %p95 = por %p93, %p94
      %p96 = scmp.ne.s32.totalorder %s84, %s85
      %p97 = scmp.eq.s32.totalorder %s28, 1
      %p98 = por %p96, %p97
      %p100 = scmp.ne.s32.totalorder %s85, %s99
      %p101 = scmp.eq.s32.totalorder %s28, 0
      %p102 = por %p100, %p101
      %s104 = sadd.s32 %s103, 1
      %p107 = scmp.eq.s32.totalorder %s22, 1
      %p108 = scmp.ne.s32.totalorder %s103, %s105
      %p109 = scmp.eq.s32.totalorder %s22, 0
      %p110 = por %p108, %p109
      %p111 = scmp.ne.s32.totalorder %s103, %s105
      %p112 = scmp.eq.s32.totalorder %s27, 1
      %p113 = por %p111, %p112
      %p114 = scmp.ne.s32.totalorder %s105, %s106
      %p115 = scmp.eq.s32.totalorder %s27, 0
      %p116 = por %p114, %p115
      %p117 = scmp.ne.s32.totalorder %s105, %s106
      %p118 = scmp.eq.s32.totalorder %s28, 1
      %p119 = por %p117, %p118
      %p121 = scmp.ne.s32.totalorder %s106, %s120
      %p122 = scmp.eq.s32.totalorder %s28, 0
      %p123 = por %p121, %p122
      %s125 = sadd.s32 %s124, 1
      %p128 = scmp.eq.s32.totalorder %s22, 1
      %p129 = scmp.ne.s32.totalorder %s124, %s126
      %p130 = scmp.eq.s32.totalorder %s22, 0
      %p131 = por %p129, %p130
      %p132 = scmp.ne.s32.totalorder %s124, %s126
      %p133 = scmp.eq.s32.totalorder %s27, 1
      %p134 = por %p132, %p133
      %p135 = scmp.ne.s32.totalorder %s126, %s127
      %p136 = scmp.eq.s32.totalorder %s27, 0
      %p137 = por %p135, %p136
      %p138 = scmp.ne.s32.totalorder %s126, %s127
      %p139 = scmp.eq.s32.totalorder %s28, 1
      %p140 = por %p138, %p139
      %p142 = scmp.ne.s32.totalorder %s127, %s141
      %p143 = scmp.eq.s32.totalorder %s28, 0
      %p144 = por %p142, %p143
      %s145 = ssub.s32 %s22, %s29
      %p146 = scmp.eq.s32.totalorder %s145, 0
      %s148 = sadd.s32 %s147, 1
      %s149 = scalar_select %p146, %s147, %s148
      %p152 = pneg %p146
      %p153 = scmp.eq.s32.totalorder %s22, 1
      %p154 = por %p152, %p153
      %p155 = scmp.ne.s32.totalorder %s147, %s150
      %p156 = scmp.eq.s32.totalorder %s22, 0
      %p157 = por %p155, %p156
      %p158 = scmp.ne.s32.totalorder %s147, %s150
      %p159 = scmp.eq.s32.totalorder %s27, 1
      %p160 = por %p158, %p159
      %p161 = scmp.ne.s32.totalorder %s150, %s151
      %p162 = scmp.eq.s32.totalorder %s27, 0
      %p163 = por %p161, %p162
      %p164 = scmp.ne.s32.totalorder %s150, %s151
      %p165 = scmp.eq.s32.totalorder %s28, 1
      %p166 = por %p164, %p165
      %p168 = scmp.ne.s32.totalorder %s151, %s167
      %p169 = scmp.eq.s32.totalorder %s28, 0
      %p170 = por %p168, %p169
      %p171 = scmp.le.s32.totalorder 1, %s22
      %p172 = scmp.lt.s32.totalorder %s22, 3
      %p173 = pnand %p171, %p172
      %p174 = pneg %p173
      // Predicated region
      $region9: #{tpu_custom_call.1} parent=5 // pred_check
        _
      $region10: #{tpu_custom_call.1} parent=5 // pred_check_branch
        %176 = sbr.rel (%p173) target = $region12
      $region11: #{tpu_custom_call.1} parent=5 // pred_region
        %s177 = ssub.s32 %s22, 1
        // Predicated region
        $region13: #{tpu_custom_call.1} parent=11 // pred_check
          %p178 = pneg %p95
        $region14: #{tpu_custom_call.1} parent=11 // pred_check_branch
          %180 = sbr.rel (%p178) target = $region16
        $region15: #{tpu_custom_call.1} parent=11 // pred_region
          %s182 = ssub.s32 16, 16
          %183 = vsyncadd [#allocation6], %s182
          %s185 = sshll.u32 %s2, 4
          %s186 = int_to_ptr.vmem [resolvable:$true] %s185
          %188 = dma.vmem_to_smem %s186, 16, [#allocation9], [#allocation6]
        $region16: #{tpu_custom_call.1} parent=11 // pred_fallthru
          _
        // Predicated region
        $region17: #{tpu_custom_call.1} parent=11 // pred_check
          %p189 = pneg %p116
        $region18: #{tpu_custom_call.1} parent=11 // pred_check_branch
          %191 = sbr.rel (%p189) target = $region20
        $region19: #{tpu_custom_call.1} parent=11 // pred_region
          %s193 = ssub.s32 512, 512
          %194 = vsyncadd [#allocation8], %s193
          %s195 = sshll.u32 [#allocation10], 4
          %s196 = int_to_ptr.vmem [resolvable:$true] %s195
          %201 = dma.hbm_to_vmem [thread:$0]  %s3, 512, %s196, [#allocation8], 128, 128, 8
        $region20: #{tpu_custom_call.1} parent=11 // pred_fallthru
          _
        // Predicated region
        $region21: #{tpu_custom_call.1} parent=11 // pred_check
          %p202 = pneg %p137
        $region22: #{tpu_custom_call.1} parent=11 // pred_check_branch
          %204 = sbr.rel (%p202) target = $region24
        $region23: #{tpu_custom_call.1} parent=11 // pred_region
          %s206 = ssub.s32 512, 512
          %207 = vsyncadd [#allocation12], %s206
          %s208 = sshll.u32 [#allocation11], 4
          %s209 = int_to_ptr.vmem [resolvable:$true] %s208
          %214 = dma.hbm_to_vmem [thread:$0]  %s4, 512, %s209, [#allocation12], 128, 128, 8
        $region24: #{tpu_custom_call.1} parent=11 // pred_fallthru
          _
      $region12: #{tpu_custom_call.1} parent=5 // pred_fallthru
        _
      %p215 = scmp.lt.s32.totalorder %s22, 2
      // Predicated region
      $region25: #{tpu_custom_call.1} parent=5 // pred_check
        %p216 = pneg %p215
      $region26: #{tpu_custom_call.1} parent=5 // pred_check_branch
        %218 = sbr.rel (%p216) target = $region28
      $region27: #{tpu_custom_call.1} parent=5 // pred_region
        // Predicated region
        $region29: #{tpu_custom_call.1} parent=27 // pred_check
          %p219 = pneg %p42
        $region30: #{tpu_custom_call.1} parent=27 // pred_check_branch
          %221 = sbr.rel (%p219) target = $region32
        $region31: #{tpu_custom_call.1} parent=27 // pred_region
          %s222 = sand.u32 %s32, 1
          %s223 = scalar_lea.sflag [#allocation4], %s222
          %s224 = sand.u32 %s32, 1
          %s225 = smul.addr %s224, 8
          %s226 = scalar_lea.vmem [#allocation3], %s225
          %s228 = ssub.s32 128, 128
          %229 = vsyncadd %s223, %s228
          %s230 = smul.addr %s22, 128
          %s231 = scalar_lea.hbm %s0, %s230
          %s233 = sshll.u32 %s226, 4
          %s234 = int_to_ptr.vmem [resolvable:$true] %s233
          %236 = dma.hbm_to_vmem [thread:$0]  %s231, 128, %s234, %s223
        $region32: #{tpu_custom_call.1} parent=27 // pred_fallthru
          _
        // Predicated region
        $region33: #{tpu_custom_call.1} parent=27 // pred_check
          %p237 = pneg %p68
        $region34: #{tpu_custom_call.1} parent=27 // pred_check_branch
          %239 = sbr.rel (%p237) target = $region36
        $region35: #{tpu_custom_call.1} parent=27 // pred_region
          %s240 = sand.u32 %s22, 1
          %s241 = scalar_lea.sflag [#allocation8], %s240
          %s242 = sand.u32 %s58, 1
          %s243 = smul.addr %s242, 2
          %s244 = scalar_lea.vmem [#allocation7], %s243
          %s246 = ssub.s32 32, 32
          %247 = vsyncadd %s241, %s246
          %s248 = smul.addr %s22, 32
          %s249 = scalar_lea.hbm %s1, %s248
          %s251 = sshll.u32 %s244, 4
          %s252 = int_to_ptr.vmem [resolvable:$true] %s251
          %254 = dma.hbm_to_vmem [thread:$0]  %s249, 32, %s252, %s241
        $region36: #{tpu_custom_call.1} parent=27 // pred_fallthru
          _
      $region28: #{tpu_custom_call.1} parent=5 // pred_fallthru
        _
      %p255 = scmp.le.s32.totalorder 1, %s22
      %p256 = scmp.lt.s32.totalorder %s22, 3
      %p257 = pnand %p255, %p256
      %p258 = pneg %p257
      // Predicated region
      $region37: #{tpu_custom_call.1} parent=5 // pred_check
        _
      $region38: #{tpu_custom_call.1} parent=5 // pred_check_branch
        %260 = sbr.rel (%p257) target = $region40
      $region39: #{tpu_custom_call.1} parent=5 // pred_region
        %s261 = ssub.s32 %s22, 1
        %s262 = sand.u32 %s35, 1
        %s263 = scalar_lea.sflag [#allocation4], %s262
        %s264 = sand.u32 %s35, 1
        %s265 = smul.addr %s264, 8
        %s266 = scalar_lea.vmem [#allocation3], %s265
        // Predicated region
        $region41: #{tpu_custom_call.1} parent=39 // pred_check
          %p267 = pneg %p48
        $region42: #{tpu_custom_call.1} parent=39 // pred_check_branch
          %269 = sbr.rel (%p267) target = $region44
        $region43: #{tpu_custom_call.1} parent=39 // pred_region
          %270 = dma.done %s263, 128
        $region44: #{tpu_custom_call.1} parent=39 // pred_fallthru
          _
        %s271 = sand.u32 %s27, 1
        %s272 = scalar_lea.sflag [#allocation8], %s271
        %s273 = sand.u32 %s61, 1
        %s274 = smul.addr %s273, 2
        %s275 = scalar_lea.vmem [#allocation7], %s274
        // Predicated region
        $region45: #{tpu_custom_call.1} parent=39 // pred_check
          %p276 = pneg %p74
        $region46: #{tpu_custom_call.1} parent=39 // pred_check_branch
          %278 = sbr.rel (%p276) target = $region48
        $region47: #{tpu_custom_call.1} parent=39 // pred_region
          %279 = dma.done %s272, 32
        $region48: #{tpu_custom_call.1} parent=39 // pred_fallthru
          _
        // Predicated region
        $region49: #{tpu_custom_call.1} parent=39 // pred_check
          %p280 = pneg %p95
        $region50: #{tpu_custom_call.1} parent=39 // pred_check_branch
          %282 = sbr.rel (%p280) target = $region52
        $region51: #{tpu_custom_call.1} parent=39 // pred_region
          %283 = dma.done [#allocation6], 16
        $region52: #{tpu_custom_call.1} parent=39 // pred_fallthru
          _
        // Predicated region
        $region53: #{tpu_custom_call.1} parent=39 // pred_check
          %p284 = pneg %p116
        $region54: #{tpu_custom_call.1} parent=39 // pred_check_branch
          %286 = sbr.rel (%p284) target = $region56
        $region55: #{tpu_custom_call.1} parent=39 // pred_region
          %287 = dma.done [#allocation8], 512
        $region56: #{tpu_custom_call.1} parent=39 // pred_fallthru
          _
        // Predicated region
        $region57: #{tpu_custom_call.1} parent=39 // pred_check
          %p288 = pneg %p137
        $region58: #{tpu_custom_call.1} parent=39 // pred_check_branch
          %290 = sbr.rel (%p288) target = $region60
        $region59: #{tpu_custom_call.1} parent=39 // pred_region
          %291 = dma.done [#allocation12], 512
        $region60: #{tpu_custom_call.1} parent=39 // pred_fallthru
          _
        %292 = sfence
        %s293 = sand.u32 %s35, 1
        %s294 = scalar_lea.sflag [#allocation4], %s293
        %s295 = sand.u32 %s35, 1
        %s296 = smul.addr %s295, 8
        %s297 = scalar_lea.vmem [#allocation3], %s296
        %p298 = pneg %p48
        %p299 = pneg %p45
        %s300 = sand.u32 %s27, 1
        %s301 = scalar_lea.sflag [#allocation8], %s300
        %s302 = sand.u32 %s61, 1
        %s303 = smul.addr %s302, 2
        %s304 = scalar_lea.vmem [#allocation7], %s303
        %p305 = pneg %p74
        %p306 = pneg %p71
        %p307 = pneg %p95
        %p308 = pneg %p92
        %p309 = pneg %p116
        %p310 = pneg %p113
        %p311 = pneg %p137
        %p312 = pneg %p134
        %p313 = pneg %p163
        %p314 = pneg %p160
        %s315 = sand.u32 %s150, 1
        %s316 = scalar_lea.sflag [#allocation5], %s315
        %s317 = sand.u32 %s150, 1
        %s318 = smul.addr %s317, 8
        %s319 = scalar_lea.vmem [#allocation13], %s318
        %v320 = vld [vmem:[%s266] sm:$0xff]
        %s321 = sld [smem:[#allocation9]]
        %s322 = sld [smem:[#allocation9 + $0x1]]
        %vm323 = vcmask 261120
        %v324 = vsel %vm323, %v320, 0.0
        %325 = vadd.xlane.f32.xlu0 %v324
        %v326 = vpop.xlane.xlu0 %325
        %v327 = vrcp.pop 32.0
        %v328 = vmul.f32 %v326, %v327
        %v329 = vsub.f32 %v320, %v328
        %v330 = vmul.f32 %v329, %v329
        %v331 = vsel %vm323, %v330, 0.0
        %332 = vadd.xlane.f32.xlu0 %v331
        %v333 = vpop.xlane.xlu0 %332
        %v334 = vmul.f32 %v333, 0.032258064
        %v335 = vrsqrt.pop %v334
        %v336 = vmul.f32 %v334, %v335
        %vm337 = vcmp.eq.f32.partialorder %v334, inf
        %v338 = vsel %vm337, %v334, %v336
        %vm339 = vcmp.eq.f32.partialorder %v334, 0.0
        %v340 = vand.u32 %v334, 2147483648
        %v341 = vsel %vm339, %v340, %v338
        %v342 = vstv %s321
        %v343 = vmul.f32 %v342, %v329
        %v344 = vadd.f32 %v341, 1e-07
        %v345 = vrcp.pop %v344
        %v346 = vmul.f32 %v343, %v345
        %v347 = vstv %s322
        %v348 = vadd.f32 %v346, %v347
        %v349 = vld [vmem:[#allocation10] sm:$0xff]
        %v350 = vld [vmem:[#allocation10 + $0x8] sm:$0xff]
        %v351 = vld [vmem:[#allocation10 + $0x10] sm:$0xff]
        %v352 = vld [vmem:[#allocation10 + $0x18] sm:$0xff]
        %v354 = vsel %vm323, %v348, 0
        %356 = vmatprep.subr.mxu0 0.0
        %357 = vmatpush1.msra.mxu0 0.0
        %358 = vmatprep.subr.mxu0 0.0
        %359 = vmatpush1.msra.mxu0 0.0
        %360 = vmatprep.subr.mxu0 0.0
        %361 = vmatpush1.msra.mxu0 0.0
        %362 = vmatprep.subr.mxu0 0.0
        %363 = vmatpush1.msra.mxu0 0.0
        %364 = vmatprep.subr.mxu0 0.0
        %365 = vmatpush1.msra.mxu0 0.0
        %366 = vmatprep.subr.mxu0 0.0
        %367 = vmatpush1.msra.mxu0 0.0
        %368 = vmatprep.subr.mxu0 0.0
        %369 = vmatpush1.msra.mxu0 0.0
        %370 = vmatprep.subr.mxu0 0.0
        %371 = vmatpush1.msra.mxu0 0.0
        %372 = vmatprep.subr.mxu0 0.0
        %373 = vmatpush1.msra.mxu0 0.0
        %374 = vmatprep.subr.mxu0 0.0
        %375 = vmatpush1.msra.mxu0 0.0
        %376 = vmatprep.subr.mxu0 0.0
        %377 = vmatpush1.msra.mxu0 0.0
        %378 = vmatprep.subr.mxu0 0.0
        %379 = vmatpush1.msra.mxu0 0.0
        %380 = vmatprep.subr.mxu0 0.0
        %381 = vmatpush1.msra.mxu0 %v352
        %382 = vmatprep.subr.mxu0 0.0
        %383 = vmatpush1.msra.mxu0 %v351
        %384 = vmatprep.subr.mxu0 0.0
        %385 = vmatpush1.msra.mxu0 %v350
        %386 = vmatprep.subr.mxu0 0.0
        %387 = vmatpush1.msra.mxu0 %v349
        %388 = vmatprep.subr.mxu0 0.0
        %389 = vmatpush2.msra.mxu0 0.0
        %390 = vmatprep.subr.mxu0 0.0
        %391 = vmatpush2.msra.mxu0 0.0
        %392 = vmatprep.subr.mxu0 0.0
        %393 = vmatpush2.msra.mxu0 0.0
        %394 = vmatprep.subr.mxu0 0.0
        %395 = vmatpush2.msra.mxu0 0.0
        %396 = vmatprep.subr.mxu0 0.0
        %397 = vmatpush2.msra.mxu0 0.0
        %398 = vmatprep.subr.mxu0 0.0
        %399 = vmatpush2.msra.mxu0 0.0
        %400 = vmatprep.subr.mxu0 0.0
        %401 = vmatpush2.msra.mxu0 0.0
        %402 = vmatprep.subr.mxu0 0.0
        %403 = vmatpush2.msra.mxu0 0.0
        %404 = vmatprep.subr.mxu0 0.0
        %405 = vmatpush2.msra.mxu0 0.0
        %406 = vmatprep.subr.mxu0 0.0
        %407 = vmatpush2.msra.mxu0 0.0
        %408 = vmatprep.subr.mxu0 0.0
        %409 = vmatpush2.msra.mxu0 0.0
        %410 = vmatprep.subr.mxu0 0.0
        %411 = vmatpush2.msra.mxu0 0.0
        %412 = vmatprep.subr.mxu0 0.0
        %413 = vmatpush2.msra.mxu0 0.0
        %414 = vmatprep.subr.mxu0 0.0
        %415 = vmatpush2.msra.mxu0 0.0
        %416 = vmatprep.subr.mxu0 0.0
        %417 = vmatpush2.msra.mxu0 0.0
        %418 = vmatprep.subr.mxu0 0.0
        %419 = vmatpush2.msra.mxu0 0.0
        %420 = vmatprep.mubr.f32.mxu0 0.0
        %421 = vmatmul.mubr.f32.gmra.mxu0 %v354
        %v422 = vpop.f32.mrf.mxu0
        %v423 = vadd.f32 0.0, %v422
        %v424 = vpop.f32.mrf.mxu0
        %425 = vdwg.mxu0
        %v426 = vld [vmem:[%s275] sm:$0x3]
        %v427 = vunpack.c.0.s8 %v426
        %v428 = vcvt.s32.f32 %v427
        %v429 = vsub.f32 %v428, 1.0
        %v430 = vmul.f32 %v429, 1e+08
        %432 = vrot.lane.b32.xlu0 %v423, 96
        %v433 = vpop.permute.xlu0 %432
        %vm434 = vcmask 64512
        %v435 = vsel %vm434, %v423, 0
        %v437 = vsel %vm434, %v433, 0
        %439 = vmatprep.subr.mxu0 0.0
        %440 = vmatpush1.xpose.msra.mxu0 0.0
        %441 = vmatprep.subr.mxu0 0.0
        %442 = vmatpush1.xpose.msra.mxu0 0.0
        %443 = vmatprep.subr.mxu0 0.0
        %444 = vmatpush1.xpose.msra.mxu0 0.0
        %445 = vmatprep.subr.mxu0 0.0
        %446 = vmatpush1.xpose.msra.mxu0 0.0
        %447 = vmatprep.subr.mxu0 0.0
        %448 = vmatpush1.xpose.msra.mxu0 0.0
        %449 = vmatprep.subr.mxu0 0.0
        %450 = vmatpush1.xpose.msra.mxu0 0.0
        %451 = vmatprep.subr.mxu0 0.0
        %452 = vmatpush1.xpose.msra.mxu0 0.0
        %453 = vmatprep.subr.mxu0 0.0
        %454 = vmatpush1.xpose.msra.mxu0 0.0
        %455 = vmatprep.subr.mxu0 0.0
        %456 = vmatpush1.xpose.msra.mxu0 0.0
        %457 = vmatprep.subr.mxu0 0.0
        %458 = vmatpush1.xpose.msra.mxu0 0.0
        %459 = vmatprep.subr.mxu0 0.0
        %460 = vmatpush1.xpose.msra.mxu0 0.0
        %461 = vmatprep.subr.mxu0 0.0
        %462 = vmatpush1.xpose.msra.mxu0 0.0
        %463 = vmatprep.subr.mxu0 0.0
        %464 = vmatpush1.xpose.msra.mxu0 0.0
        %465 = vmatprep.subr.mxu0 0.0
        %466 = vmatpush1.xpose.msra.mxu0 0.0
        %467 = vmatprep.subr.mxu0 0.0
        %468 = vmatpush1.xpose.msra.mxu0 0.0
        %469 = vmatprep.subr.mxu0 0.0
        %470 = vmatpush1.xpose.msra.mxu0 %v437
        %471 = vmatprep.subr.mxu0 0.0
        %472 = vmatpush2.xpose.msra.mxu0 0.0
        %473 = vmatprep.subr.mxu0 0.0
        %474 = vmatpush2.xpose.msra.mxu0 0.0
        %475 = vmatprep.subr.mxu0 0.0
        %476 = vmatpush2.xpose.msra.mxu0 0.0
        %477 = vmatprep.subr.mxu0 0.0
        %478 = vmatpush2.xpose.msra.mxu0 0.0
        %479 = vmatprep.subr.mxu0 0.0
        %480 = vmatpush2.xpose.msra.mxu0 0.0
        %481 = vmatprep.subr.mxu0 0.0
        %482 = vmatpush2.xpose.msra.mxu0 0.0
        %483 = vmatprep.subr.mxu0 0.0
        %484 = vmatpush2.xpose.msra.mxu0 0.0
        %485 = vmatprep.subr.mxu0 0.0
        %486 = vmatpush2.xpose.msra.mxu0 0.0
        %487 = vmatprep.subr.mxu0 0.0
        %488 = vmatpush2.xpose.msra.mxu0 0.0
        %489 = vmatprep.subr.mxu0 0.0
        %490 = vmatpush2.xpose.msra.mxu0 0.0
        %491 = vmatprep.subr.mxu0 0.0
        %492 = vmatpush2.xpose.msra.mxu0 0.0
        %493 = vmatprep.subr.mxu0 0.0
        %494 = vmatpush2.xpose.msra.mxu0 0.0
        %495 = vmatprep.subr.mxu0 0.0
        %496 = vmatpush2.xpose.msra.mxu0 0.0
        %497 = vmatprep.subr.mxu0 0.0
        %498 = vmatpush2.xpose.msra.mxu0 0.0
        %499 = vmatprep.subr.mxu0 0.0
        %500 = vmatpush2.xpose.msra.mxu0 0.0
        %501 = vmatprep.subr.mxu0 0.0
        %502 = vmatpush2.xpose.msra.mxu0 0.0
        %503 = vmatprep.mubr.f32.mxu0 0.0
        %504 = vmatmul.mubr.f32.gmra.mxu0 %v435
        %v505 = vpop.f32.mrf.mxu0
        %v506 = vadd.f32 0.0, %v505
        %v507 = vpop.f32.mrf.mxu0
        %508 = vdwg.mxu0
        %v509 = vmul.f32 %v506, 0.35355338
        %v510 = vadd.f32 %v509, %v430
        %v511 = vsel %vm434, %v510, -inf
        %512 = vmax.xlane.f32.xlu0 %v511
        %v513 = vpop.xlane.xlu0 %512
        %v514 = vsub.f32 %v510, %v513
        %v515 = vmul.f32 %v514, 1.442695
        %v516 = vpow.pop %v515
        %v517 = vsel %vm434, %v516, 0.0
        %518 = vadd.xlane.f32.xlu0 %v517
        %v519 = vpop.xlane.xlu0 %518
        %v520 = vrcp.pop %v519
        %v521 = vmul.f32 %v516, %v520
        %522 = vrot.lane.b32.xlu0 %v423, 64
        %v523 = vpop.permute.xlu0 %522
        %v526 = vsel %vm434, %v521, 0
        %528 = vmatprep.subr.mxu0 0.0
        %529 = vmatpush1.msra.mxu0 0.0
        %530 = vmatprep.subr.mxu0 0.0
        %531 = vmatpush1.msra.mxu0 0.0
        %532 = vmatprep.subr.mxu0 0.0
        %533 = vmatpush1.msra.mxu0 0.0
        %534 = vmatprep.subr.mxu0 0.0
        %535 = vmatpush1.msra.mxu0 0.0
        %536 = vmatprep.subr.mxu0 0.0
        %537 = vmatpush1.msra.mxu0 0.0
        %538 = vmatprep.subr.mxu0 0.0
        %539 = vmatpush1.msra.mxu0 0.0
        %540 = vmatprep.subr.mxu0 0.0
        %541 = vmatpush1.msra.mxu0 0.0
        %542 = vmatprep.subr.mxu0 0.0
        %543 = vmatpush1.msra.mxu0 0.0
        %544 = vmatprep.subr.mxu0 0.0
        %545 = vmatpush1.msra.mxu0 0.0
        %546 = vmatprep.subr.mxu0 0.0
        %547 = vmatpush1.msra.mxu0 0.0
        %548 = vmatprep.subr.mxu0 0.0
        %549 = vmatpush1.msra.mxu0 0.0
        %550 = vmatprep.subr.mxu0 0.0
        %551 = vmatpush1.msra.mxu0 0.0
        %552 = vmatprep.subr.mxu0 0.0
        %553 = vmatpush1.msra.mxu0 0.0
        %554 = vmatprep.subr.mxu0 0.0
        %555 = vmatpush1.msra.mxu0 0.0
        %556 = vmatprep.subr.mxu0 0.0
        %557 = vmatpush1.msra.mxu0 0.0
        %558 = vmatprep.subr.mxu0 0.0
        %559 = vmatpush1.msra.mxu0 %v523
        %560 = vmatprep.subr.mxu0 0.0
        %561 = vmatpush2.msra.mxu0 0.0
        %562 = vmatprep.subr.mxu0 0.0
        %563 = vmatpush2.msra.mxu0 0.0
        %564 = vmatprep.subr.mxu0 0.0
        %565 = vmatpush2.msra.mxu0 0.0
        %566 = vmatprep.subr.mxu0 0.0
        %567 = vmatpush2.msra.mxu0 0.0
        %568 = vmatprep.subr.mxu0 0.0
        %569 = vmatpush2.msra.mxu0 0.0
        %570 = vmatprep.subr.mxu0 0.0
        %571 = vmatpush2.msra.mxu0 0.0
        %572 = vmatprep.subr.mxu0 0.0
        %573 = vmatpush2.msra.mxu0 0.0
        %574 = vmatprep.subr.mxu0 0.0
        %575 = vmatpush2.msra.mxu0 0.0
        %576 = vmatprep.subr.mxu0 0.0
        %577 = vmatpush2.msra.mxu0 0.0
        %578 = vmatprep.subr.mxu0 0.0
        %579 = vmatpush2.msra.mxu0 0.0
        %580 = vmatprep.subr.mxu0 0.0
        %581 = vmatpush2.msra.mxu0 0.0
        %582 = vmatprep.subr.mxu0 0.0
        %583 = vmatpush2.msra.mxu0 0.0
        %584 = vmatprep.subr.mxu0 0.0
        %585 = vmatpush2.msra.mxu0 0.0
        %586 = vmatprep.subr.mxu0 0.0
        %587 = vmatpush2.msra.mxu0 0.0
        %588 = vmatprep.subr.mxu0 0.0
        %589 = vmatpush2.msra.mxu0 0.0
        %590 = vmatprep.subr.mxu0 0.0
        %591 = vmatpush2.msra.mxu0 0.0
        %592 = vmatprep.mubr.f32.mxu0 0.0
        %593 = vmatmul.mubr.f32.gmra.mxu0 %v526
        %v594 = vpop.f32.mrf.mxu0
        %v595 = vadd.f32 0.0, %v594
        %v596 = vpop.f32.mrf.mxu0
        %597 = vdwg.mxu0
        %598 = vst.msk [vmem:[#allocation2] sm:$0xff] %vm434, %v595
        %599 = vrot.lane.b32.xlu0 %v423, 120
        %v600 = vpop.permute.xlu0 %599
        %601 = vrot.lane.b32.xlu0 %v423, 88
        %v602 = vpop.permute.xlu0 %601
        %v603 = vsel %vm434, %v600, 0
        %v605 = vsel %vm434, %v602, 0
        %607 = vmatprep.subr.mxu0 0.0
        %608 = vmatpush1.xpose.msra.mxu0 0.0
        %609 = vmatprep.subr.mxu0 0.0
        %610 = vmatpush1.xpose.msra.mxu0 0.0
        %611 = vmatprep.subr.mxu0 0.0
        %612 = vmatpush1.xpose.msra.mxu0 0.0
        %613 = vmatprep.subr.mxu0 0.0
        %614 = vmatpush1.xpose.msra.mxu0 0.0
        %615 = vmatprep.subr.mxu0 0.0
        %616 = vmatpush1.xpose.msra.mxu0 0.0
        %617 = vmatprep.subr.mxu0 0.0
        %618 = vmatpush1.xpose.msra.mxu0 0.0
        %619 = vmatprep.subr.mxu0 0.0
        %620 = vmatpush1.xpose.msra.mxu0 0.0
        %621 = vmatprep.subr.mxu0 0.0
        %622 = vmatpush1.xpose.msra.mxu0 0.0
        %623 = vmatprep.subr.mxu0 0.0
        %624 = vmatpush1.xpose.msra.mxu0 0.0
        %625 = vmatprep.subr.mxu0 0.0
        %626 = vmatpush1.xpose.msra.mxu0 0.0
        %627 = vmatprep.subr.mxu0 0.0
        %628 = vmatpush1.xpose.msra.mxu0 0.0
        %629 = vmatprep.subr.mxu0 0.0
        %630 = vmatpush1.xpose.msra.mxu0 0.0
        %631 = vmatprep.subr.mxu0 0.0
        %632 = vmatpush1.xpose.msra.mxu0 0.0
        %633 = vmatprep.subr.mxu0 0.0
        %634 = vmatpush1.xpose.msra.mxu0 0.0
        %635 = vmatprep.subr.mxu0 0.0
        %636 = vmatpush1.xpose.msra.mxu0 0.0
        %637 = vmatprep.subr.mxu0 0.0
        %638 = vmatpush1.xpose.msra.mxu0 %v605
        %639 = vmatprep.subr.mxu0 0.0
        %640 = vmatpush2.xpose.msra.mxu0 0.0
        %641 = vmatprep.subr.mxu0 0.0
        %642 = vmatpush2.xpose.msra.mxu0 0.0
        %643 = vmatprep.subr.mxu0 0.0
        %644 = vmatpush2.xpose.msra.mxu0 0.0
        %645 = vmatprep.subr.mxu0 0.0
        %646 = vmatpush2.xpose.msra.mxu0 0.0
        %647 = vmatprep.subr.mxu0 0.0
        %648 = vmatpush2.xpose.msra.mxu0 0.0
        %649 = vmatprep.subr.mxu0 0.0
        %650 = vmatpush2.xpose.msra.mxu0 0.0
        %651 = vmatprep.subr.mxu0 0.0
        %652 = vmatpush2.xpose.msra.mxu0 0.0
        %653 = vmatprep.subr.mxu0 0.0
        %654 = vmatpush2.xpose.msra.mxu0 0.0
        %655 = vmatprep.subr.mxu0 0.0
        %656 = vmatpush2.xpose.msra.mxu0 0.0
        %657 = vmatprep.subr.mxu0 0.0
        %658 = vmatpush2.xpose.msra.mxu0 0.0
        %659 = vmatprep.subr.mxu0 0.0
        %660 = vmatpush2.xpose.msra.mxu0 0.0
        %661 = vmatprep.subr.mxu0 0.0
        %662 = vmatpush2.xpose.msra.mxu0 0.0
        %663 = vmatprep.subr.mxu0 0.0
        %664 = vmatpush2.xpose.msra.mxu0 0.0
        %665 = vmatprep.subr.mxu0 0.0
        %666 = vmatpush2.xpose.msra.mxu0 0.0
        %667 = vmatprep.subr.mxu0 0.0
        %668 = vmatpush2.xpose.msra.mxu0 0.0
        %669 = vmatprep.subr.mxu0 0.0
        %670 = vmatpush2.xpose.msra.mxu0 0.0
        %671 = vmatprep.mubr.f32.mxu0 0.0
        %672 = vmatmul.mubr.f32.gmra.mxu0 %v603
        %v673 = vpop.f32.mrf.mxu0
        %v674 = vadd.f32 0.0, %v673
        %v675 = vpop.f32.mrf.mxu0
        %676 = vdwg.mxu0
        %v677 = vmul.f32 %v674, 0.35355338
        %v678 = vadd.f32 %v677, %v430
        %v679 = vsel %vm434, %v678, -inf
        %680 = vmax.xlane.f32.xlu0 %v679
        %v681 = vpop.xlane.xlu0 %680
        %v682 = vsub.f32 %v678, %v681
        %v683 = vmul.f32 %v682, 1.442695
        %v684 = vpow.pop %v683
        %v685 = vsel %vm434, %v684, 0.0
        %686 = vadd.xlane.f32.xlu0 %v685
        %v687 = vpop.xlane.xlu0 %686
        %v688 = vrcp.pop %v687
        %v689 = vmul.f32 %v684, %v688
        %690 = vrot.lane.b32.xlu0 %v423, 56
        %v691 = vpop.permute.xlu0 %690
        %v694 = vsel %vm434, %v689, 0
        %696 = vmatprep.subr.mxu0 0.0
        %697 = vmatpush1.msra.mxu0 0.0
        %698 = vmatprep.subr.mxu0 0.0
        %699 = vmatpush1.msra.mxu0 0.0
        %700 = vmatprep.subr.mxu0 0.0
        %701 = vmatpush1.msra.mxu0 0.0
        %702 = vmatprep.subr.mxu0 0.0
        %703 = vmatpush1.msra.mxu0 0.0
        %704 = vmatprep.subr.mxu0 0.0
        %705 = vmatpush1.msra.mxu0 0.0
        %706 = vmatprep.subr.mxu0 0.0
        %707 = vmatpush1.msra.mxu0 0.0
        %708 = vmatprep.subr.mxu0 0.0
        %709 = vmatpush1.msra.mxu0 0.0
        %710 = vmatprep.subr.mxu0 0.0
        %711 = vmatpush1.msra.mxu0 0.0
        %712 = vmatprep.subr.mxu0 0.0
        %713 = vmatpush1.msra.mxu0 0.0
        %714 = vmatprep.subr.mxu0 0.0
        %715 = vmatpush1.msra.mxu0 0.0
        %716 = vmatprep.subr.mxu0 0.0
        %717 = vmatpush1.msra.mxu0 0.0
        %718 = vmatprep.subr.mxu0 0.0
        %719 = vmatpush1.msra.mxu0 0.0
        %720 = vmatprep.subr.mxu0 0.0
        %721 = vmatpush1.msra.mxu0 0.0
        %722 = vmatprep.subr.mxu0 0.0
        %723 = vmatpush1.msra.mxu0 0.0
        %724 = vmatprep.subr.mxu0 0.0
        %725 = vmatpush1.msra.mxu0 0.0
        %726 = vmatprep.subr.mxu0 0.0
        %727 = vmatpush1.msra.mxu0 %v691
        %728 = vmatprep.subr.mxu0 0.0
        %729 = vmatpush2.msra.mxu0 0.0
        %730 = vmatprep.subr.mxu0 0.0
        %731 = vmatpush2.msra.mxu0 0.0
        %732 = vmatprep.subr.mxu0 0.0
        %733 = vmatpush2.msra.mxu0 0.0
        %734 = vmatprep.subr.mxu0 0.0
        %735 = vmatpush2.msra.mxu0 0.0
        %736 = vmatprep.subr.mxu0 0.0
        %737 = vmatpush2.msra.mxu0 0.0
        %738 = vmatprep.subr.mxu0 0.0
        %739 = vmatpush2.msra.mxu0 0.0
        %740 = vmatprep.subr.mxu0 0.0
        %741 = vmatpush2.msra.mxu0 0.0
        %742 = vmatprep.subr.mxu0 0.0
        %743 = vmatpush2.msra.mxu0 0.0
        %744 = vmatprep.subr.mxu0 0.0
        %745 = vmatpush2.msra.mxu0 0.0
        %746 = vmatprep.subr.mxu0 0.0
        %747 = vmatpush2.msra.mxu0 0.0
        %748 = vmatprep.subr.mxu0 0.0
        %749 = vmatpush2.msra.mxu0 0.0
        %750 = vmatprep.subr.mxu0 0.0
        %751 = vmatpush2.msra.mxu0 0.0
        %752 = vmatprep.subr.mxu0 0.0
        %753 = vmatpush2.msra.mxu0 0.0
        %754 = vmatprep.subr.mxu0 0.0
        %755 = vmatpush2.msra.mxu0 0.0
        %756 = vmatprep.subr.mxu0 0.0
        %757 = vmatpush2.msra.mxu0 0.0
        %758 = vmatprep.subr.mxu0 0.0
        %759 = vmatpush2.msra.mxu0 0.0
        %760 = vmatprep.mubr.f32.mxu0 0.0
        %761 = vmatmul.mubr.f32.gmra.mxu0 %v694
        %v762 = vpop.f32.mrf.mxu0
        %v763 = vadd.f32 0.0, %v762
        %v764 = vpop.f32.mrf.mxu0
        %765 = vdwg.mxu0
        %767 = vrot.lane.b32.xlu0 %v763, 8
        %v768 = vpop.permute.xlu0 %767
        %vm770 = vcmask 130112
        %771 = vst.msk [vmem:[#allocation2] sm:$0xff] %vm770, %v768
        %772 = vrot.lane.b32.xlu0 %v423, 112
        %v773 = vpop.permute.xlu0 %772
        %774 = vrot.lane.b32.xlu0 %v423, 80
        %v775 = vpop.permute.xlu0 %774
        %v776 = vsel %vm434, %v773, 0
        %v778 = vsel %vm434, %v775, 0
        %780 = vmatprep.subr.mxu0 0.0
        %781 = vmatpush1.xpose.msra.mxu0 0.0
        %782 = vmatprep.subr.mxu0 0.0
        %783 = vmatpush1.xpose.msra.mxu0 0.0
        %784 = vmatprep.subr.mxu0 0.0
        %785 = vmatpush1.xpose.msra.mxu0 0.0
        %786 = vmatprep.subr.mxu0 0.0
        %787 = vmatpush1.xpose.msra.mxu0 0.0
        %788 = vmatprep.subr.mxu0 0.0
        %789 = vmatpush1.xpose.msra.mxu0 0.0
        %790 = vmatprep.subr.mxu0 0.0
        %791 = vmatpush1.xpose.msra.mxu0 0.0
        %792 = vmatprep.subr.mxu0 0.0
        %793 = vmatpush1.xpose.msra.mxu0 0.0
        %794 = vmatprep.subr.mxu0 0.0
        %795 = vmatpush1.xpose.msra.mxu0 0.0
        %796 = vmatprep.subr.mxu0 0.0
        %797 = vmatpush1.xpose.msra.mxu0 0.0
        %798 = vmatprep.subr.mxu0 0.0
        %799 = vmatpush1.xpose.msra.mxu0 0.0
        %800 = vmatprep.subr.mxu0 0.0
        %801 = vmatpush1.xpose.msra.mxu0 0.0
        %802 = vmatprep.subr.mxu0 0.0
        %803 = vmatpush1.xpose.msra.mxu0 0.0
        %804 = vmatprep.subr.mxu0 0.0
        %805 = vmatpush1.xpose.msra.mxu0 0.0
        %806 = vmatprep.subr.mxu0 0.0
        %807 = vmatpush1.xpose.msra.mxu0 0.0
        %808 = vmatprep.subr.mxu0 0.0
        %809 = vmatpush1.xpose.msra.mxu0 0.0
        %810 = vmatprep.subr.mxu0 0.0
        %811 = vmatpush1.xpose.msra.mxu0 %v778
        %812 = vmatprep.subr.mxu0 0.0
        %813 = vmatpush2.xpose.msra.mxu0 0.0
        %814 = vmatprep.subr.mxu0 0.0
        %815 = vmatpush2.xpose.msra.mxu0 0.0
        %816 = vmatprep.subr.mxu0 0.0
        %817 = vmatpush2.xpose.msra.mxu0 0.0
        %818 = vmatprep.subr.mxu0 0.0
        %819 = vmatpush2.xpose.msra.mxu0 0.0
        %820 = vmatprep.subr.mxu0 0.0
        %821 = vmatpush2.xpose.msra.mxu0 0.0
        %822 = vmatprep.subr.mxu0 0.0
        %823 = vmatpush2.xpose.msra.mxu0 0.0
        %824 = vmatprep.subr.mxu0 0.0
        %825 = vmatpush2.xpose.msra.mxu0 0.0
        %826 = vmatprep.subr.mxu0 0.0
        %827 = vmatpush2.xpose.msra.mxu0 0.0
        %828 = vmatprep.subr.mxu0 0.0
        %829 = vmatpush2.xpose.msra.mxu0 0.0
        %830 = vmatprep.subr.mxu0 0.0
        %831 = vmatpush2.xpose.msra.mxu0 0.0
        %832 = vmatprep.subr.mxu0 0.0
        %833 = vmatpush2.xpose.msra.mxu0 0.0
        %834 = vmatprep.subr.mxu0 0.0
        %835 = vmatpush2.xpose.msra.mxu0 0.0
        %836 = vmatprep.subr.mxu0 0.0
        %837 = vmatpush2.xpose.msra.mxu0 0.0
        %838 = vmatprep.subr.mxu0 0.0
        %839 = vmatpush2.xpose.msra.mxu0 0.0
        %840 = vmatprep.subr.mxu0 0.0
        %841 = vmatpush2.xpose.msra.mxu0 0.0
        %842 = vmatprep.subr.mxu0 0.0
        %843 = vmatpush2.xpose.msra.mxu0 0.0
        %844 = vmatprep.mubr.f32.mxu0 0.0
        %845 = vmatmul.mubr.f32.gmra.mxu0 %v776
        %v846 = vpop.f32.mrf.mxu0
        %v847 = vadd.f32 0.0, %v846
        %v848 = vpop.f32.mrf.mxu0
        %849 = vdwg.mxu0
        %v850 = vmul.f32 %v847, 0.35355338
        %v851 = vadd.f32 %v850, %v430
        %v852 = vsel %vm434, %v851, -inf
        %853 = vmax.xlane.f32.xlu0 %v852
        %v854 = vpop.xlane.xlu0 %853
        %v855 = vsub.f32 %v851, %v854
        %v856 = vmul.f32 %v855, 1.442695
        %v857 = vpow.pop %v856
        %v858 = vsel %vm434, %v857, 0.0
        %859 = vadd.xlane.f32.xlu0 %v858
        %v860 = vpop.xlane.xlu0 %859
        %v861 = vrcp.pop %v860
        %v862 = vmul.f32 %v857, %v861
        %863 = vrot.lane.b32.xlu0 %v423, 48
        %v864 = vpop.permute.xlu0 %863
        %v867 = vsel %vm434, %v862, 0
        %869 = vmatprep.subr.mxu0 0.0
        %870 = vmatpush1.msra.mxu0 0.0
        %871 = vmatprep.subr.mxu0 0.0
        %872 = vmatpush1.msra.mxu0 0.0
        %873 = vmatprep.subr.mxu0 0.0
        %874 = vmatpush1.msra.mxu0 0.0
        %875 = vmatprep.subr.mxu0 0.0
        %876 = vmatpush1.msra.mxu0 0.0
        %877 = vmatprep.subr.mxu0 0.0
        %878 = vmatpush1.msra.mxu0 0.0
        %879 = vmatprep.subr.mxu0 0.0
        %880 = vmatpush1.msra.mxu0 0.0
        %881 = vmatprep.subr.mxu0 0.0
        %882 = vmatpush1.msra.mxu0 0.0
        %883 = vmatprep.subr.mxu0 0.0
        %884 = vmatpush1.msra.mxu0 0.0
        %885 = vmatprep.subr.mxu0 0.0
        %886 = vmatpush1.msra.mxu0 0.0
        %887 = vmatprep.subr.mxu0 0.0
        %888 = vmatpush1.msra.mxu0 0.0
        %889 = vmatprep.subr.mxu0 0.0
        %890 = vmatpush1.msra.mxu0 0.0
        %891 = vmatprep.subr.mxu0 0.0
        %892 = vmatpush1.msra.mxu0 0.0
        %893 = vmatprep.subr.mxu0 0.0
        %894 = vmatpush1.msra.mxu0 0.0
        %895 = vmatprep.subr.mxu0 0.0
        %896 = vmatpush1.msra.mxu0 0.0
        %897 = vmatprep.subr.mxu0 0.0
        %898 = vmatpush1.msra.mxu0 0.0
        %899 = vmatprep.subr.mxu0 0.0
        %900 = vmatpush1.msra.mxu0 %v864
        %901 = vmatprep.subr.mxu0 0.0
        %902 = vmatpush2.msra.mxu0 0.0
        %903 = vmatprep.subr.mxu0 0.0
        %904 = vmatpush2.msra.mxu0 0.0
        %905 = vmatprep.subr.mxu0 0.0
        %906 = vmatpush2.msra.mxu0 0.0
        %907 = vmatprep.subr.mxu0 0.0
        %908 = vmatpush2.msra.mxu0 0.0
        %909 = vmatprep.subr.mxu0 0.0
        %910 = vmatpush2.msra.mxu0 0.0
        %911 = vmatprep.subr.mxu0 0.0
        %912 = vmatpush2.msra.mxu0 0.0
        %913 = vmatprep.subr.mxu0 0.0
        %914 = vmatpush2.msra.mxu0 0.0
        %915 = vmatprep.subr.mxu0 0.0
        %916 = vmatpush2.msra.mxu0 0.0
        %917 = vmatprep.subr.mxu0 0.0
        %918 = vmatpush2.msra.mxu0 0.0
        %919 = vmatprep.subr.mxu0 0.0
        %920 = vmatpush2.msra.mxu0 0.0
        %921 = vmatprep.subr.mxu0 0.0
        %922 = vmatpush2.msra.mxu0 0.0
        %923 = vmatprep.subr.mxu0 0.0
        %924 = vmatpush2.msra.mxu0 0.0
        %925 = vmatprep.subr.mxu0 0.0
        %926 = vmatpush2.msra.mxu0 0.0
        %927 = vmatprep.subr.mxu0 0.0
        %928 = vmatpush2.msra.mxu0 0.0
        %929 = vmatprep.subr.mxu0 0.0
        %930 = vmatpush2.msra.mxu0 0.0
        %931 = vmatprep.subr.mxu0 0.0
        %932 = vmatpush2.msra.mxu0 0.0
        %933 = vmatprep.mubr.f32.mxu0 0.0
        %934 = vmatmul.mubr.f32.gmra.mxu0 %v867
        %v935 = vpop.f32.mrf.mxu0
        %v936 = vadd.f32 0.0, %v935
        %v937 = vpop.f32.mrf.mxu0
        %938 = vdwg.mxu0
        %940 = vrot.lane.b32.xlu0 %v936, 16
        %v941 = vpop.permute.xlu0 %940
        %vm943 = vcmask 195712
        %944 = vst.msk [vmem:[#allocation2] sm:$0xff] %vm943, %v941
        %945 = vrot.lane.b32.xlu0 %v423, 104
        %v946 = vpop.permute.xlu0 %945
        %947 = vrot.lane.b32.xlu0 %v423, 72
        %v948 = vpop.permute.xlu0 %947
        %v949 = vsel %vm434, %v946, 0
        %v951 = vsel %vm434, %v948, 0
        %953 = vmatprep.subr.mxu0 0.0
        %954 = vmatpush1.xpose.msra.mxu0 0.0
        %955 = vmatprep.subr.mxu0 0.0
        %956 = vmatpush1.xpose.msra.mxu0 0.0
        %957 = vmatprep.subr.mxu0 0.0
        %958 = vmatpush1.xpose.msra.mxu0 0.0
        %959 = vmatprep.subr.mxu0 0.0
        %960 = vmatpush1.xpose.msra.mxu0 0.0
        %961 = vmatprep.subr.mxu0 0.0
        %962 = vmatpush1.xpose.msra.mxu0 0.0
        %963 = vmatprep.subr.mxu0 0.0
        %964 = vmatpush1.xpose.msra.mxu0 0.0
        %965 = vmatprep.subr.mxu0 0.0
        %966 = vmatpush1.xpose.msra.mxu0 0.0
        %967 = vmatprep.subr.mxu0 0.0
        %968 = vmatpush1.xpose.msra.mxu0 0.0
        %969 = vmatprep.subr.mxu0 0.0
        %970 = vmatpush1.xpose.msra.mxu0 0.0
        %971 = vmatprep.subr.mxu0 0.0
        %972 = vmatpush1.xpose.msra.mxu0 0.0
        %973 = vmatprep.subr.mxu0 0.0
        %974 = vmatpush1.xpose.msra.mxu0 0.0
        %975 = vmatprep.subr.mxu0 0.0
        %976 = vmatpush1.xpose.msra.mxu0 0.0
        %977 = vmatprep.subr.mxu0 0.0
        %978 = vmatpush1.xpose.msra.mxu0 0.0
        %979 = vmatprep.subr.mxu0 0.0
        %980 = vmatpush1.xpose.msra.mxu0 0.0
        %981 = vmatprep.subr.mxu0 0.0
        %982 = vmatpush1.xpose.msra.mxu0 0.0
        %983 = vmatprep.subr.mxu0 0.0
        %984 = vmatpush1.xpose.msra.mxu0 %v951
        %985 = vmatprep.subr.mxu0 0.0
        %986 = vmatpush2.xpose.msra.mxu0 0.0
        %987 = vmatprep.subr.mxu0 0.0
        %988 = vmatpush2.xpose.msra.mxu0 0.0
        %989 = vmatprep.subr.mxu0 0.0
        %990 = vmatpush2.xpose.msra.mxu0 0.0
        %991 = vmatprep.subr.mxu0 0.0
        %992 = vmatpush2.xpose.msra.mxu0 0.0
        %993 = vmatprep.subr.mxu0 0.0
        %994 = vmatpush2.xpose.msra.mxu0 0.0
        %995 = vmatprep.subr.mxu0 0.0
        %996 = vmatpush2.xpose.msra.mxu0 0.0
        %997 = vmatprep.subr.mxu0 0.0
        %998 = vmatpush2.xpose.msra.mxu0 0.0
        %999 = vmatprep.subr.mxu0 0.0
        %1000 = vmatpush2.xpose.msra.mxu0 0.0
        %1001 = vmatprep.subr.mxu0 0.0
        %1002 = vmatpush2.xpose.msra.mxu0 0.0
        %1003 = vmatprep.subr.mxu0 0.0
        %1004 = vmatpush2.xpose.msra.mxu0 0.0
        %1005 = vmatprep.subr.mxu0 0.0
        %1006 = vmatpush2.xpose.msra.mxu0 0.0
        %1007 = vmatprep.subr.mxu0 0.0
        %1008 = vmatpush2.xpose.msra.mxu0 0.0
        %1009 = vmatprep.subr.mxu0 0.0
        %1010 = vmatpush2.xpose.msra.mxu0 0.0
        %1011 = vmatprep.subr.mxu0 0.0
        %1012 = vmatpush2.xpose.msra.mxu0 0.0
        %1013 = vmatprep.subr.mxu0 0.0
        %1014 = vmatpush2.xpose.msra.mxu0 0.0
        %1015 = vmatprep.subr.mxu0 0.0
        %1016 = vmatpush2.xpose.msra.mxu0 0.0
        %1017 = vmatprep.mubr.f32.mxu0 0.0
        %1018 = vmatmul.mubr.f32.gmra.mxu0 %v949
        %v1019 = vpop.f32.mrf.mxu0
        %v1020 = vadd.f32 0.0, %v1019
        %v1021 = vpop.f32.mrf.mxu0
        %1022 = vdwg.mxu0
        %v1023 = vmul.f32 %v1020, 0.35355338
        %v1024 = vadd.f32 %v1023, %v430
        %v1025 = vsel %vm434, %v1024, -inf
        %1026 = vmax.xlane.f32.xlu0 %v1025
        %v1027 = vpop.xlane.xlu0 %1026
        %v1028 = vsub.f32 %v1024, %v1027
        %v1029 = vmul.f32 %v1028, 1.442695
        %v1030 = vpow.pop %v1029
        %v1031 = vsel %vm434, %v1030, 0.0
        %1032 = vadd.xlane.f32.xlu0 %v1031
        %v1033 = vpop.xlane.xlu0 %1032
        %v1034 = vrcp.pop %v1033
        %v1035 = vmul.f32 %v1030, %v1034
        %1036 = vrot.lane.b32.xlu0 %v423, 40
        %v1037 = vpop.permute.xlu0 %1036
        %v1040 = vsel %vm434, %v1035, 0
        %1042 = vmatprep.subr.mxu0 0.0
        %1043 = vmatpush1.msra.mxu0 0.0
        %1044 = vmatprep.subr.mxu0 0.0
        %1045 = vmatpush1.msra.mxu0 0.0
        %1046 = vmatprep.subr.mxu0 0.0
        %1047 = vmatpush1.msra.mxu0 0.0
        %1048 = vmatprep.subr.mxu0 0.0
        %1049 = vmatpush1.msra.mxu0 0.0
        %1050 = vmatprep.subr.mxu0 0.0
        %1051 = vmatpush1.msra.mxu0 0.0
        %1052 = vmatprep.subr.mxu0 0.0
        %1053 = vmatpush1.msra.mxu0 0.0
        %1054 = vmatprep.subr.mxu0 0.0
        %1055 = vmatpush1.msra.mxu0 0.0
        %1056 = vmatprep.subr.mxu0 0.0
        %1057 = vmatpush1.msra.mxu0 0.0
        %1058 = vmatprep.subr.mxu0 0.0
        %1059 = vmatpush1.msra.mxu0 0.0
        %1060 = vmatprep.subr.mxu0 0.0
        %1061 = vmatpush1.msra.mxu0 0.0
        %1062 = vmatprep.subr.mxu0 0.0
        %1063 = vmatpush1.msra.mxu0 0.0
        %1064 = vmatprep.subr.mxu0 0.0
        %1065 = vmatpush1.msra.mxu0 0.0
        %1066 = vmatprep.subr.mxu0 0.0
        %1067 = vmatpush1.msra.mxu0 0.0
        %1068 = vmatprep.subr.mxu0 0.0
        %1069 = vmatpush1.msra.mxu0 0.0
        %1070 = vmatprep.subr.mxu0 0.0
        %1071 = vmatpush1.msra.mxu0 0.0
        %1072 = vmatprep.subr.mxu0 0.0
        %1073 = vmatpush1.msra.mxu0 %v1037
        %1074 = vmatprep.subr.mxu0 0.0
        %1075 = vmatpush2.msra.mxu0 0.0
        %1076 = vmatprep.subr.mxu0 0.0
        %1077 = vmatpush2.msra.mxu0 0.0
        %1078 = vmatprep.subr.mxu0 0.0
        %1079 = vmatpush2.msra.mxu0 0.0
        %1080 = vmatprep.subr.mxu0 0.0
        %1081 = vmatpush2.msra.mxu0 0.0
        %1082 = vmatprep.subr.mxu0 0.0
        %1083 = vmatpush2.msra.mxu0 0.0
        %1084 = vmatprep.subr.mxu0 0.0
        %1085 = vmatpush2.msra.mxu0 0.0
        %1086 = vmatprep.subr.mxu0 0.0
        %1087 = vmatpush2.msra.mxu0 0.0
        %1088 = vmatprep.subr.mxu0 0.0
        %1089 = vmatpush2.msra.mxu0 0.0
        %1090 = vmatprep.subr.mxu0 0.0
        %1091 = vmatpush2.msra.mxu0 0.0
        %1092 = vmatprep.subr.mxu0 0.0
        %1093 = vmatpush2.msra.mxu0 0.0
        %1094 = vmatprep.subr.mxu0 0.0
        %1095 = vmatpush2.msra.mxu0 0.0
        %1096 = vmatprep.subr.mxu0 0.0
        %1097 = vmatpush2.msra.mxu0 0.0
        %1098 = vmatprep.subr.mxu0 0.0
        %1099 = vmatpush2.msra.mxu0 0.0
        %1100 = vmatprep.subr.mxu0 0.0
        %1101 = vmatpush2.msra.mxu0 0.0
        %1102 = vmatprep.subr.mxu0 0.0
        %1103 = vmatpush2.msra.mxu0 0.0
        %1104 = vmatprep.subr.mxu0 0.0
        %1105 = vmatpush2.msra.mxu0 0.0
        %1106 = vmatprep.mubr.f32.mxu0 0.0
        %1107 = vmatmul.mubr.f32.gmra.mxu0 %v1040
        %v1108 = vpop.f32.mrf.mxu0
        %v1109 = vadd.f32 0.0, %v1108
        %v1110 = vpop.f32.mrf.mxu0
        %1111 = vdwg.mxu0
        %1113 = vrot.lane.b32.xlu0 %v1109, 24
        %v1114 = vpop.permute.xlu0 %1113
        %vm1116 = vcmask 261312
        %1117 = vst.msk [vmem:[#allocation2] sm:$0xff] %vm1116, %v1114
        %v1118 = vld [vmem:[#allocation2] sm:$0xff]
        %v1119 = vld [vmem:[#allocation11] sm:$0xff]
        %v1120 = vld [vmem:[#allocation11 + $0x8] sm:$0xff]
        %v1121 = vld [vmem:[#allocation11 + $0x10] sm:$0xff]
        %v1122 = vld [vmem:[#allocation11 + $0x18] sm:$0xff]
        %v1124 = vsel %vm323, %v1118, 0
        %1126 = vmatprep.subr.mxu0 0.0
        %1127 = vmatpush1.msra.mxu0 0.0
        %1128 = vmatprep.subr.mxu0 0.0
        %1129 = vmatpush1.msra.mxu0 0.0
        %1130 = vmatprep.subr.mxu0 0.0
        %1131 = vmatpush1.msra.mxu0 0.0
        %1132 = vmatprep.subr.mxu0 0.0
        %1133 = vmatpush1.msra.mxu0 0.0
        %1134 = vmatprep.subr.mxu0 0.0
        %1135 = vmatpush1.msra.mxu0 0.0
        %1136 = vmatprep.subr.mxu0 0.0
        %1137 = vmatpush1.msra.mxu0 0.0
        %1138 = vmatprep.subr.mxu0 0.0
        %1139 = vmatpush1.msra.mxu0 0.0
        %1140 = vmatprep.subr.mxu0 0.0
        %1141 = vmatpush1.msra.mxu0 0.0
        %1142 = vmatprep.subr.mxu0 0.0
        %1143 = vmatpush1.msra.mxu0 0.0
        %1144 = vmatprep.subr.mxu0 0.0
        %1145 = vmatpush1.msra.mxu0 0.0
        %1146 = vmatprep.subr.mxu0 0.0
        %1147 = vmatpush1.msra.mxu0 0.0
        %1148 = vmatprep.subr.mxu0 0.0
        %1149 = vmatpush1.msra.mxu0 0.0
        %1150 = vmatprep.subr.mxu0 0.0
        %1151 = vmatpush1.msra.mxu0 %v1122
        %1152 = vmatprep.subr.mxu0 0.0
        %1153 = vmatpush1.msra.mxu0 %v1121
        %1154 = vmatprep.subr.mxu0 0.0
        %1155 = vmatpush1.msra.mxu0 %v1120
        %1156 = vmatprep.subr.mxu0 0.0
        %1157 = vmatpush1.msra.mxu0 %v1119
        %1158 = vmatprep.subr.mxu0 0.0
        %1159 = vmatpush2.msra.mxu0 0.0
        %1160 = vmatprep.subr.mxu0 0.0
        %1161 = vmatpush2.msra.mxu0 0.0
        %1162 = vmatprep.subr.mxu0 0.0
        %1163 = vmatpush2.msra.mxu0 0.0
        %1164 = vmatprep.subr.mxu0 0.0
        %1165 = vmatpush2.msra.mxu0 0.0
        %1166 = vmatprep.subr.mxu0 0.0
        %1167 = vmatpush2.msra.mxu0 0.0
        %1168 = vmatprep.subr.mxu0 0.0
        %1169 = vmatpush2.msra.mxu0 0.0
        %1170 = vmatprep.subr.mxu0 0.0
        %1171 = vmatpush2.msra.mxu0 0.0
        %1172 = vmatprep.subr.mxu0 0.0
        %1173 = vmatpush2.msra.mxu0 0.0
        %1174 = vmatprep.subr.mxu0 0.0
        %1175 = vmatpush2.msra.mxu0 0.0
        %1176 = vmatprep.subr.mxu0 0.0
        %1177 = vmatpush2.msra.mxu0 0.0
        %1178 = vmatprep.subr.mxu0 0.0
        %1179 = vmatpush2.msra.mxu0 0.0
        %1180 = vmatprep.subr.mxu0 0.0
        %1181 = vmatpush2.msra.mxu0 0.0
        %1182 = vmatprep.subr.mxu0 0.0
        %1183 = vmatpush2.msra.mxu0 0.0
        %1184 = vmatprep.subr.mxu0 0.0
        %1185 = vmatpush2.msra.mxu0 0.0
        %1186 = vmatprep.subr.mxu0 0.0
        %1187 = vmatpush2.msra.mxu0 0.0
        %1188 = vmatprep.subr.mxu0 0.0
        %1189 = vmatpush2.msra.mxu0 0.0
        %1190 = vmatprep.mubr.f32.mxu0 0.0
        %1191 = vmatmul.mubr.f32.gmra.mxu0 %v1124
        %v1192 = vpop.f32.mrf.mxu0
        %v1193 = vadd.f32 0.0, %v1192
        %v1194 = vpop.f32.mrf.mxu0
        %1195 = vdwg.mxu0
        %v1196 = vadd.f32 %v320, %v1193
        %1197 = vst.msk [vmem:[%s319] sm:$0xff] %vm323, %v1196
        %s1198 = sand.u32 %s150, 1
        %s1199 = scalar_lea.sflag [#allocation5], %s1198
        %s1200 = sand.u32 %s150, 1
        %s1201 = smul.addr %s1200, 8
        %s1202 = scalar_lea.vmem [#allocation13], %s1201
        // Predicated region
        $region61: #{tpu_custom_call.1} parent=39 // pred_check
          %p1203 = pneg %p160
        $region62: #{tpu_custom_call.1} parent=39 // pred_check_branch
          %1205 = sbr.rel (%p1203) target = $region64
        $region63: #{tpu_custom_call.1} parent=39 // pred_region
          %s1207 = ssub.s32 128, 128
          %1208 = vsyncadd %s1199, %s1207
          %s1209 = smul.addr %s27, 128
          %s1210 = scalar_lea.hbm %s5, %s1209
          %s1212 = sshll.u32 %s1202, 4
          %s1213 = int_to_ptr.vmem [resolvable:$true] %s1212
          %1215 = dma.vmem_to_hbm [thread:$0]  %s1213, 128, %s1210, %s1199
        $region64: #{tpu_custom_call.1} parent=39 // pred_fallthru
          _
      $region40: #{tpu_custom_call.1} parent=5 // pred_fallthru
        _
      %p1216 = scmp.le.s32.totalorder 2, %s22
      // Predicated region
      $region65: #{tpu_custom_call.1} parent=5 // pred_check
        %p1217 = pneg %p1216
      $region66: #{tpu_custom_call.1} parent=5 // pred_check_branch
        %1219 = sbr.rel (%p1217) target = $region68
      $region67: #{tpu_custom_call.1} parent=5 // pred_region
        %s1220 = ssub.s32 %s22, 2
        // Predicated region
        $region69: #{tpu_custom_call.1} parent=67 // pred_check
          %p1221 = pneg %p166
        $region70: #{tpu_custom_call.1} parent=67 // pred_check_branch
          %1223 = sbr.rel (%p1221) target = $region72
        $region71: #{tpu_custom_call.1} parent=67 // pred_region
          %s1224 = sand.u32 %s151, 1
          %s1225 = scalar_lea.sflag [#allocation5], %s1224
          %s1226 = sand.u32 %s151, 1
          %s1227 = smul.addr %s1226, 8
          %s1228 = scalar_lea.vmem [#allocation13], %s1227
          %1229 = dma.done %s1225, 128
        $region72: #{tpu_custom_call.1} parent=67 // pred_fallthru
          _
      $region68: #{tpu_custom_call.1} parent=5 // pred_fallthru
        _
    $region6: #{tpu_custom_call.1} parent=1 // loop_footer
      %s26 = sadd.s32 1, %s22
    $region7: #{tpu_custom_call.1} parent=1 // loop_footer_branch
      %21 = sbr.rel target = $region3
    $region8: #{tpu_custom_call.1} parent=1 // loop_exit
      _
    %1230 = vsyncpa [#allocation4], 1
    %s1231 = scalar_lea.sflag [#allocation4], 1
    %1232 = vsyncpa %s1231, 1
    %1233 = vsyncpa [#allocation8], 1
    %s1234 = scalar_lea.sflag [#allocation8], 1
    %1235 = vsyncpa %s1234, 1
    %1236 = vsyncpa [#allocation12], 1
    %1237 = vsyncpa [#allocation5], 1
    %s1238 = scalar_lea.sflag [#allocation5], 1
    %1239 = vsyncpa %s1238, 1
    %1240 = vsyncpa [#allocation6], 1
    %s1241 = scalar_lea.sflag [#allocation6], 1
    %1242 = vsyncpa %s1241, 1

</llo_original>
